<compile_context>
chip_gen: v6e
topology: v6e:2x2x1
jax: 0.10.0
libtpu: 0.0.40
codegen_flags: <defaults>
</compile_context>

<pallas_src>
import jax
import jax.numpy as jnp
from jax.experimental import pallas as pl
from jax.experimental.pallas import tpu as pltpu

IN_FEATURES = 28 ** 2          # 784
IN_PAD = 896                   # 7 * 128, lane-aligned K for layer 1 (in-kernel)
OUT_FEATURES = 10
OUT_PAD = 128                  # lane-dense output slab

_DIMS = [(IN_FEATURES, 256), (256, 128), (128, 128), (128, 128),
         (128, 128), (128, 64), (64, OUT_FEATURES)]


def _round_up(x, m):
    return ((x + m - 1) // m) * m


# ----------------------------------------------------------------------------
# Kernel: whole MLP fused; weights VMEM-resident, one batch tile per grid step.
# ----------------------------------------------------------------------------
def _ann_kernel(x_ref,
                w1, b1, w2, b2, w3, b3, w4, b4, w5, b5, w6, b6, wf, bf,
                o_ref):
    def dense_relu_bf16(h, w_ref, b_ref):
        y = jnp.dot(h, w_ref[...], preferred_element_type=jnp.float32)
        y = jnp.maximum(y + b_ref[...], 0.0)      # bias (1, out) broadcasts
        return y.astype(jnp.bfloat16)

    h = x_ref[...]                                # (TB, 784) bf16
    # Explicitly zero the 784 -> 896 K-pad lanes in VMEM (W1 rows 784..895 are
    # also zero, so the padded contraction contributes exactly 0).
    pad = jnp.zeros((h.shape[0], IN_PAD - IN_FEATURES), h.dtype)
    h = jnp.concatenate([h, pad], axis=1)         # (TB, 896) bf16

    h = dense_relu_bf16(h, w1, b1)
    h = dense_relu_bf16(h, w2, b2)
    h = dense_relu_bf16(h, w3, b3)
    h = dense_relu_bf16(h, w4, b4)
    h = dense_relu_bf16(h, w5, b5)
    h = dense_relu_bf16(h, w6, b6)
    # Final layer (N padded to 128 lanes); ReLU after final layer matches spec.
    y = jnp.dot(h, wf[...], preferred_element_type=jnp.float32)
    y = jnp.maximum(y + bf[...], 0.0)
    o_ref[...] = y.astype(o_ref.dtype)            # bf16 lane-dense store


# ----------------------------------------------------------------------------
# Param prep: (W_t (in,out), b (1,out)) -> bf16 weights (padded), f32 biases
# (final bias padded to 128 lanes).
# ----------------------------------------------------------------------------
def _prep_params(params):
    flat = []
    last = len(params) - 1
    for idx, (w, b) in enumerate(params):
        w = jnp.asarray(w, jnp.float32)
        b = jnp.asarray(b, jnp.float32).reshape(1, -1)
        if idx == 0:                               # pad K: 784 -> 896 (zeros)
            w = jnp.pad(w, ((0, IN_PAD - w.shape[0]), (0, 0)))
        if idx == last:                            # pad N: 10 -> 128 (zeros)
            w = jnp.pad(w, ((0, 0), (0, OUT_PAD - w.shape[1])))
            b = jnp.pad(b, ((0, 0), (0, OUT_PAD - b.shape[1])))
        flat.extend([w.astype(jnp.bfloat16), b])   # weights bf16, biases f32
    return flat


# ----------------------------------------------------------------------------
# Wrapper: batch tiling, remainder-only padding, pallas_call.
# ----------------------------------------------------------------------------
def ann_forward(x, params, *, tile_b=1024):
    x2d = x.reshape(-1, IN_FEATURES).astype(jnp.bfloat16)
    B = x2d.shape[0]

    # Batch tile: multiple of 8.  If the whole batch fits in one tile, split it
    # in two so the "parallel" batch axis has >= 2 grid steps (v7x megacore).
    B8 = _round_up(max(B, 1), 8)
    if B8 <= tile_b:
        TB = max(8, _round_up(-(-B8 // 2), 8)) if B8 > 8 else 8
    else:
        TB = tile_b
    B_pad = _round_up(B, TB)
    num_tiles = B_pad // TB

    if B_pad > B:                                  # pad batch remainder only
        x2d = jnp.pad(x2d, ((0, B_pad - B), (0, 0)))

    flat = _prep_params(params)

    # Input spec: deeper pipeline only when the grid is long enough to use it.
    if num_tiles >= 4:
        x_spec = pl.BlockSpec((TB, IN_FEATURES), lambda i: (i, 0),
                              pipeline_mode=pl.Buffered(3))
    else:
        x_spec = pl.BlockSpec((TB, IN_FEATURES), lambda i: (i, 0))

    in_specs = [x_spec]
    for a in flat:
        # Full-array block, same block every grid step -> fetched once,
        # stays VMEM-resident across the whole grid.
        in_specs.append(pl.BlockSpec(a.shape, lambda i: (0, 0)))
    out_spec = pl.BlockSpec((TB, OUT_PAD), lambda i: (i, 0))

    flops = 2 * B_pad * sum(fi * fo for fi, fo in _DIMS)
    bytes_accessed = (B_pad * IN_FEATURES * 2
                      + sum(a.size * a.dtype.itemsize for a in flat)
                      + B_pad * OUT_PAD * 2)

    out = pl.pallas_call(
        _ann_kernel,
        out_shape=jax.ShapeDtypeStruct((B_pad, OUT_PAD), jnp.bfloat16),
        grid_spec=pltpu.PrefetchScalarGridSpec(
            num_scalar_prefetch=0,
            grid=(num_tiles,),
            in_specs=in_specs,
            out_specs=out_spec,
        ),
        compiler_params=pltpu.CompilerParams(
            dimension_semantics=("parallel",),     # shards batch tiles on v7x
            vmem_limit_bytes=40 * 1024 * 1024,
        ),
        cost_estimate=pl.CostEstimate(
            flops=flops, transcendentals=0, bytes_accessed=bytes_accessed),
    )(x2d, *flat)

    return out[:B, :OUT_FEATURES].astype(jnp.float32)


# ----------------------------------------------------------------------------
# Deterministic parameter init (PyTorch-style uniform(-1/sqrt(fan_in), ...)),
# stored pre-transposed as (in, out), bias (1, out).
# ----------------------------------------------------------------------------
def init_params(key):
    params = []
    for i, (fan_in, fan_out) in enumerate(_DIMS):
        kw, kb = jax.random.split(jax.random.fold_in(key, i))
        bound = 1.0 / jnp.sqrt(fan_in)
        w_t = jax.random.uniform(kw, (fan_in, fan_out), jnp.float32,
                                 minval=-bound, maxval=bound)
        b = jax.random.uniform(kb, (1, fan_out), jnp.float32,
                               minval=-bound, maxval=bound)
        params.append((w_t, b))
    return params


# ----------------------------------------------------------------------------
# References.
#   _bf16: mirrors kernel numerics (bf16 matmuls, f32 acc, bf16 output slab).
#   _f32 : pure float32, mirrors the original PyTorch module.
# ----------------------------------------------------------------------------
def ann_reference_bf16(x, params):
    h = x.reshape(-1, IN_FEATURES).astype(jnp.bfloat16)
    last = len(params) - 1
    for i, (w, b) in enumerate(params):
        y = jnp.dot(h, w.astype(jnp.bfloat16),
                    preferred_element_type=jnp.float32)
        y = jnp.maximum(y + b.astype(jnp.float32), 0.0)
        h = y.astype(jnp.bfloat16)
    return h.astype(jnp.float32)


def ann_reference_f32(x, params):
    h = x.reshape(-1, IN_FEATURES).astype(jnp.float32)
    for w, b in params:
        h = jnp.maximum(jnp.dot(h, w) + b, 0.0)
    return h


if __name__ == "__main__":
    key = jax.random.PRNGKey(0)
    kx, kp = jax.random.split(key)

    # Small MNIST-like batch: (batch=2, channels=1, 28, 28) NCHW.
    x = jax.random.normal(kx, (2, 1, 28, 28), jnp.float32)
    params = init_params(kp)

    out = ann_forward(x, params)
    out = jax.block_until_ready(out)
    assert out.shape == (2, 10)

    ref_bf16 = ann_reference_bf16(x, params)
    ref_f32 = ann_reference_f32(x, params)
    assert jnp.allclose(out, ref_bf16, atol=1e-2, rtol=1e-2), \
        "mismatch vs bf16-mirrored reference"
    assert jnp.allclose(out, ref_f32, atol=5e-2, rtol=5e-2), \
        "mismatch vs f32 reference"

    print("KERNEL_OK")
</pallas_src>

<mosaic_0001>
module attributes {stable_mosaic.version = 11 : i64} {
  func.func @_ann_kernel(%arg0: i32, %arg1: memref<8x784xbf16, #tpu.memory_space<vmem>>, %arg2: memref<896x256xbf16, #tpu.memory_space<vmem>>, %arg3: memref<1x256xf32, #tpu.memory_space<vmem>>, %arg4: memref<256x128xbf16, #tpu.memory_space<vmem>>, %arg5: memref<1x128xf32, #tpu.memory_space<vmem>>, %arg6: memref<128x128xbf16, #tpu.memory_space<vmem>>, %arg7: memref<1x128xf32, #tpu.memory_space<vmem>>, %arg8: memref<128x128xbf16, #tpu.memory_space<vmem>>, %arg9: memref<1x128xf32, #tpu.memory_space<vmem>>, %arg10: memref<128x128xbf16, #tpu.memory_space<vmem>>, %arg11: memref<1x128xf32, #tpu.memory_space<vmem>>, %arg12: memref<128x64xbf16, #tpu.memory_space<vmem>>, %arg13: memref<1x64xf32, #tpu.memory_space<vmem>>, %arg14: memref<64x128xbf16, #tpu.memory_space<vmem>>, %arg15: memref<1x128xf32, #tpu.memory_space<vmem>>, %arg16: memref<8x128xbf16, #tpu.memory_space<vmem>>) attributes {dimension_semantics = [#tpu.dimension_semantics<parallel>], iteration_bounds = array<i64: 1>, scalar_prefetch = 0 : i64, scratch_operands = 0 : i64, tpu.core_type = #tpu.core_type<tc>, window_params = [{transform_indices = @transform_0, window_bounds = array<i64: 8, 784>}, {pipeline_mode = #tpu.pipeline_mode<synchronous>, transform_indices = @transform_1, window_bounds = array<i64: 896, 256>}, {pipeline_mode = #tpu.pipeline_mode<synchronous>, transform_indices = @transform_2, window_bounds = array<i64: 1, 256>}, {pipeline_mode = #tpu.pipeline_mode<synchronous>, transform_indices = @transform_3, window_bounds = array<i64: 256, 128>}, {pipeline_mode = #tpu.pipeline_mode<synchronous>, transform_indices = @transform_4, window_bounds = array<i64: 1, 128>}, {pipeline_mode = #tpu.pipeline_mode<synchronous>, transform_indices = @transform_5, window_bounds = array<i64: 128, 128>}, {pipeline_mode = #tpu.pipeline_mode<synchronous>, transform_indices = @transform_6, window_bounds = array<i64: 1, 128>}, {pipeline_mode = #tpu.pipeline_mode<synchronous>, transform_indices = @transform_7, window_bounds = array<i64: 128, 128>}, {pipeline_mode = #tpu.pipeline_mode<synchronous>, transform_indices = @transform_8, window_bounds = array<i64: 1, 128>}, {pipeline_mode = #tpu.pipeline_mode<synchronous>, transform_indices = @transform_9, window_bounds = array<i64: 128, 128>}, {pipeline_mode = #tpu.pipeline_mode<synchronous>, transform_indices = @transform_10, window_bounds = array<i64: 1, 128>}, {pipeline_mode = #tpu.pipeline_mode<synchronous>, transform_indices = @transform_11, window_bounds = array<i64: 128, 64>}, {pipeline_mode = #tpu.pipeline_mode<synchronous>, transform_indices = @transform_12, window_bounds = array<i64: 1, 64>}, {pipeline_mode = #tpu.pipeline_mode<synchronous>, transform_indices = @transform_13, window_bounds = array<i64: 64, 128>}, {pipeline_mode = #tpu.pipeline_mode<synchronous>, transform_indices = @transform_14, window_bounds = array<i64: 1, 128>}, {transform_indices = @transform_15, window_bounds = array<i64: 8, 128>}]} {
    %c0 = arith.constant 0 : index
    %c0_0 = arith.constant 0 : index
    %0 = vector.load %arg1[%c0, %c0_0] : memref<8x784xbf16, #tpu.memory_space<vmem>>, vector<8x784xbf16>
    %cst = arith.constant 0.000000e+00 : bf16
    %1 = vector.broadcast %cst : bf16 to vector<8x112xbf16>
    %2 = tpu.concatenate %0, %1 in 1 : vector<8x784xbf16>, vector<8x112xbf16> -> vector<8x896xbf16>
    %c0_1 = arith.constant 0 : index
    %c0_2 = arith.constant 0 : index
    %3 = vector.load %arg2[%c0_1, %c0_2] : memref<896x256xbf16, #tpu.memory_space<vmem>>, vector<896x256xbf16>
    %cst_3 = arith.constant dense<0.000000e+00> : vector<8x256xf32>
    %4 = tpu.matmul %2, %3, %cst_3 {dimension_numbers = #tpu.dot_dimension_numbers<[1], [0], [0], [1], [0, 0, 1, 1], [], []>} : vector<8x896xbf16>, vector<896x256xbf16>, vector<8x256xf32> -> vector<8x256xf32>
    %c0_4 = arith.constant 0 : index
    %c0_5 = arith.constant 0 : index
    %5 = vector.load %arg3[%c0_4, %c0_5] : memref<1x256xf32, #tpu.memory_space<vmem>>, vector<1x256xf32>
    %6 = vector.broadcast %5 : vector<1x256xf32> to vector<8x256xf32>
    %7 = arith.addf %4, %6 : vector<8x256xf32>
    %cst_6 = arith.constant 0.000000e+00 : f32
    %8 = vector.broadcast %cst_6 : f32 to vector<8x256xf32>
    %9 = arith.maximumf %7, %8 : vector<8x256xf32>
    %10 = arith.truncf %9 : vector<8x256xf32> to vector<8x256xbf16>
    %c0_7 = arith.constant 0 : index
    %c0_8 = arith.constant 0 : index
    %11 = vector.load %arg4[%c0_7, %c0_8] : memref<256x128xbf16, #tpu.memory_space<vmem>>, vector<256x128xbf16>
    %cst_9 = arith.constant dense<0.000000e+00> : vector<8x128xf32>
    %12 = tpu.matmul %10, %11, %cst_9 {dimension_numbers = #tpu.dot_dimension_numbers<[1], [0], [0], [1], [0, 0, 1, 1], [], []>} : vector<8x256xbf16>, vector<256x128xbf16>, vector<8x128xf32> -> vector<8x128xf32>
    %c0_10 = arith.constant 0 : index
    %c0_11 = arith.constant 0 : index
    %13 = vector.load %arg5[%c0_10, %c0_11] : memref<1x128xf32, #tpu.memory_space<vmem>>, vector<1x128xf32>
    %14 = vector.broadcast %13 : vector<1x128xf32> to vector<8x128xf32>
    %15 = arith.addf %12, %14 : vector<8x128xf32>
    %cst_12 = arith.constant 0.000000e+00 : f32
    %16 = vector.broadcast %cst_12 : f32 to vector<8x128xf32>
    %17 = arith.maximumf %15, %16 : vector<8x128xf32>
    %18 = arith.truncf %17 : vector<8x128xf32> to vector<8x128xbf16>
    %c0_13 = arith.constant 0 : index
    %c0_14 = arith.constant 0 : index
    %19 = vector.load %arg6[%c0_13, %c0_14] : memref<128x128xbf16, #tpu.memory_space<vmem>>, vector<128x128xbf16>
    %cst_15 = arith.constant dense<0.000000e+00> : vector<8x128xf32>
    %20 = tpu.matmul %18, %19, %cst_15 {dimension_numbers = #tpu.dot_dimension_numbers<[1], [0], [0], [1], [0, 0, 1, 1], [], []>} : vector<8x128xbf16>, vector<128x128xbf16>, vector<8x128xf32> -> vector<8x128xf32>
    %c0_16 = arith.constant 0 : index
    %c0_17 = arith.constant 0 : index
    %21 = vector.load %arg7[%c0_16, %c0_17] : memref<1x128xf32, #tpu.memory_space<vmem>>, vector<1x128xf32>
    %22 = vector.broadcast %21 : vector<1x128xf32> to vector<8x128xf32>
    %23 = arith.addf %20, %22 : vector<8x128xf32>
    %cst_18 = arith.constant 0.000000e+00 : f32
    %24 = vector.broadcast %cst_18 : f32 to vector<8x128xf32>
    %25 = arith.maximumf %23, %24 : vector<8x128xf32>
    %26 = arith.truncf %25 : vector<8x128xf32> to vector<8x128xbf16>
    %c0_19 = arith.constant 0 : index
    %c0_20 = arith.constant 0 : index
    %27 = vector.load %arg8[%c0_19, %c0_20] : memref<128x128xbf16, #tpu.memory_space<vmem>>, vector<128x128xbf16>
    %cst_21 = arith.constant dense<0.000000e+00> : vector<8x128xf32>
    %28 = tpu.matmul %26, %27, %cst_21 {dimension_numbers = #tpu.dot_dimension_numbers<[1], [0], [0], [1], [0, 0, 1, 1], [], []>} : vector<8x128xbf16>, vector<128x128xbf16>, vector<8x128xf32> -> vector<8x128xf32>
    %c0_22 = arith.constant 0 : index
    %c0_23 = arith.constant 0 : index
    %29 = vector.load %arg9[%c0_22, %c0_23] : memref<1x128xf32, #tpu.memory_space<vmem>>, vector<1x128xf32>
    %30 = vector.broadcast %29 : vector<1x128xf32> to vector<8x128xf32>
    %31 = arith.addf %28, %30 : vector<8x128xf32>
    %cst_24 = arith.constant 0.000000e+00 : f32
    %32 = vector.broadcast %cst_24 : f32 to vector<8x128xf32>
    %33 = arith.maximumf %31, %32 : vector<8x128xf32>
    %34 = arith.truncf %33 : vector<8x128xf32> to vector<8x128xbf16>
    %c0_25 = arith.constant 0 : index
    %c0_26 = arith.constant 0 : index
    %35 = vector.load %arg10[%c0_25, %c0_26] : memref<128x128xbf16, #tpu.memory_space<vmem>>, vector<128x128xbf16>
    %cst_27 = arith.constant dense<0.000000e+00> : vector<8x128xf32>
    %36 = tpu.matmul %34, %35, %cst_27 {dimension_numbers = #tpu.dot_dimension_numbers<[1], [0], [0], [1], [0, 0, 1, 1], [], []>} : vector<8x128xbf16>, vector<128x128xbf16>, vector<8x128xf32> -> vector<8x128xf32>
    %c0_28 = arith.constant 0 : index
    %c0_29 = arith.constant 0 : index
    %37 = vector.load %arg11[%c0_28, %c0_29] : memref<1x128xf32, #tpu.memory_space<vmem>>, vector<1x128xf32>
    %38 = vector.broadcast %37 : vector<1x128xf32> to vector<8x128xf32>
    %39 = arith.addf %36, %38 : vector<8x128xf32>
    %cst_30 = arith.constant 0.000000e+00 : f32
    %40 = vector.broadcast %cst_30 : f32 to vector<8x128xf32>
    %41 = arith.maximumf %39, %40 : vector<8x128xf32>
    %42 = arith.truncf %41 : vector<8x128xf32> to vector<8x128xbf16>
    %c0_31 = arith.constant 0 : index
    %c0_32 = arith.constant 0 : index
    %43 = vector.load %arg12[%c0_31, %c0_32] : memref<128x64xbf16, #tpu.memory_space<vmem>>, vector<128x64xbf16>
    %cst_33 = arith.constant dense<0.000000e+00> : vector<8x64xf32>
    %44 = tpu.matmul %42, %43, %cst_33 {dimension_numbers = #tpu.dot_dimension_numbers<[1], [0], [0], [1], [0, 0, 1, 1], [], []>} : vector<8x128xbf16>, vector<128x64xbf16>, vector<8x64xf32> -> vector<8x64xf32>
    %c0_34 = arith.constant 0 : index
    %c0_35 = arith.constant 0 : index
    %45 = vector.load %arg13[%c0_34, %c0_35] : memref<1x64xf32, #tpu.memory_space<vmem>>, vector<1x64xf32>
    %46 = vector.broadcast %45 : vector<1x64xf32> to vector<8x64xf32>
    %47 = arith.addf %44, %46 : vector<8x64xf32>
    %cst_36 = arith.constant 0.000000e+00 : f32
    %48 = vector.broadcast %cst_36 : f32 to vector<8x64xf32>
    %49 = arith.maximumf %47, %48 : vector<8x64xf32>
    %50 = arith.truncf %49 : vector<8x64xf32> to vector<8x64xbf16>
    %c0_37 = arith.constant 0 : index
    %c0_38 = arith.constant 0 : index
    %51 = vector.load %arg14[%c0_37, %c0_38] : memref<64x128xbf16, #tpu.memory_space<vmem>>, vector<64x128xbf16>
    %cst_39 = arith.constant dense<0.000000e+00> : vector<8x128xf32>
    %52 = tpu.matmul %50, %51, %cst_39 {dimension_numbers = #tpu.dot_dimension_numbers<[1], [0], [0], [1], [0, 0, 1, 1], [], []>} : vector<8x64xbf16>, vector<64x128xbf16>, vector<8x128xf32> -> vector<8x128xf32>
    %c0_40 = arith.constant 0 : index
    %c0_41 = arith.constant 0 : index
    %53 = vector.load %arg15[%c0_40, %c0_41] : memref<1x128xf32, #tpu.memory_space<vmem>>, vector<1x128xf32>
    %54 = vector.broadcast %53 : vector<1x128xf32> to vector<8x128xf32>
    %55 = arith.addf %52, %54 : vector<8x128xf32>
    %cst_42 = arith.constant 0.000000e+00 : f32
    %56 = vector.broadcast %cst_42 : f32 to vector<8x128xf32>
    %57 = arith.maximumf %55, %56 : vector<8x128xf32>
    %58 = arith.truncf %57 : vector<8x128xf32> to vector<8x128xbf16>
    %c0_43 = arith.constant 0 : index
    %c0_44 = arith.constant 0 : index
    %59 = vector.load %arg16[%c0_43, %c0_44] : memref<8x128xbf16, #tpu.memory_space<vmem>>, vector<8x128xbf16>
    tpu.vector_store %arg16[%c0_43, %c0_44], %58 {strides = array<i32>} : memref<8x128xbf16, #tpu.memory_space<vmem>>, vector<8x128xbf16>,
    return
  }
  func.func @transform_0(%arg0: i32) -> (i32, i32) {
    %c0_i32 = arith.constant 0 : i32
    %c0_i32_0 = arith.constant 0 : i32
    return %arg0, %c0_i32 : i32, i32
  }
  func.func @transform_1(%arg0: i32) -> (i32, i32) {
    %c0_i32 = arith.constant 0 : i32
    %c0_i32_0 = arith.constant 0 : i32
    %c0_i32_1 = arith.constant 0 : i32
    return %c0_i32, %c0_i32_0 : i32, i32
  }
  func.func @transform_2(%arg0: i32) -> (i32, i32) {
    %c0_i32 = arith.constant 0 : i32
    %c0_i32_0 = arith.constant 0 : i32
    %c0_i32_1 = arith.constant 0 : i32
    return %c0_i32, %c0_i32_0 : i32, i32
  }
  func.func @transform_3(%arg0: i32) -> (i32, i32) {
    %c0_i32 = arith.constant 0 : i32
    %c0_i32_0 = arith.constant 0 : i32
    %c0_i32_1 = arith.constant 0 : i32
    return %c0_i32, %c0_i32_0 : i32, i32
  }
  func.func @transform_4(%arg0: i32) -> (i32, i32) {
    %c0_i32 = arith.constant 0 : i32
    %c0_i32_0 = arith.constant 0 : i32
    %c0_i32_1 = arith.constant 0 : i32
    return %c0_i32, %c0_i32_0 : i32, i32
  }
  func.func @transform_5(%arg0: i32) -> (i32, i32) {
    %c0_i32 = arith.constant 0 : i32
    %c0_i32_0 = arith.constant 0 : i32
    %c0_i32_1 = arith.constant 0 : i32
    return %c0_i32, %c0_i32_0 : i32, i32
  }
  func.func @transform_6(%arg0: i32) -> (i32, i32) {
    %c0_i32 = arith.constant 0 : i32
    %c0_i32_0 = arith.constant 0 : i32
    %c0_i32_1 = arith.constant 0 : i32
    return %c0_i32, %c0_i32_0 : i32, i32
  }
  func.func @transform_7(%arg0: i32) -> (i32, i32) {
    %c0_i32 = arith.constant 0 : i32
    %c0_i32_0 = arith.constant 0 : i32
    %c0_i32_1 = arith.constant 0 : i32
    return %c0_i32, %c0_i32_0 : i32, i32
  }
  func.func @transform_8(%arg0: i32) -> (i32, i32) {
    %c0_i32 = arith.constant 0 : i32
    %c0_i32_0 = arith.constant 0 : i32
    %c0_i32_1 = arith.constant 0 : i32
    return %c0_i32, %c0_i32_0 : i32, i32
  }
  func.func @transform_9(%arg0: i32) -> (i32, i32) {
    %c0_i32 = arith.constant 0 : i32
    %c0_i32_0 = arith.constant 0 : i32
    %c0_i32_1 = arith.constant 0 : i32
    return %c0_i32, %c0_i32_0 : i32, i32
  }
  func.func @transform_10(%arg0: i32) -> (i32, i32) {
    %c0_i32 = arith.constant 0 : i32
    %c0_i32_0 = arith.constant 0 : i32
    %c0_i32_1 = arith.constant 0 : i32
    return %c0_i32, %c0_i32_0 : i32, i32
  }
  func.func @transform_11(%arg0: i32) -> (i32, i32) {
    %c0_i32 = arith.constant 0 : i32
    %c0_i32_0 = arith.constant 0 : i32
    %c0_i32_1 = arith.constant 0 : i32
    return %c0_i32, %c0_i32_0 : i32, i32
  }
  func.func @transform_12(%arg0: i32) -> (i32, i32) {
    %c0_i32 = arith.constant 0 : i32
    %c0_i32_0 = arith.constant 0 : i32
    %c0_i32_1 = arith.constant 0 : i32
    return %c0_i32, %c0_i32_0 : i32, i32
  }
  func.func @transform_13(%arg0: i32) -> (i32, i32) {
    %c0_i32 = arith.constant 0 : i32
    %c0_i32_0 = arith.constant 0 : i32
    %c0_i32_1 = arith.constant 0 : i32
    return %c0_i32, %c0_i32_0 : i32, i32
  }
  func.func @transform_14(%arg0: i32) -> (i32, i32) {
    %c0_i32 = arith.constant 0 : i32
    %c0_i32_0 = arith.constant 0 : i32
    %c0_i32_1 = arith.constant 0 : i32
    return %c0_i32, %c0_i32_0 : i32, i32
  }
  func.func @transform_15(%arg0: i32) -> (i32, i32) {
    %c0_i32 = arith.constant 0 : i32
    %c0_i32_0 = arith.constant 0 : i32
    return %arg0, %c0_i32 : i32, i32
  }
}

</mosaic_0001>

<llo_original>
// kernel: tpu_custom_call.1
$region0: #{tpu_custom_call.1}
  #allocation0 [shape = 'u32[]', space=smem, size = 0x4, offset = 0x4, fixed_abs, tag = 'smem constant byte address 0x4 - core index']
  #allocation1 [shape = 'u32[144,128]{1,0:T(1,128)}', space=vmem, size = 0x12000, scoped, tag = 'internal scratch']
  %s0 = inlined_call_operand.hbm [shape: bf16[8,784], index: 0, kind: input, shape index: {}]
  %s1 = inlined_call_operand.hbm [shape: bf16[896,256], index: 1, kind: input, shape index: {}]
  %s2 = inlined_call_operand.vmem [shape: f32[1,256], index: 2, kind: input, shape index: {}]
  %s3 = inlined_call_operand.hbm [shape: bf16[256,128], index: 3, kind: input, shape index: {}]
  %s4 = inlined_call_operand.vmem [shape: f32[1,128], index: 4, kind: input, shape index: {}]
  %s5 = inlined_call_operand.vmem [shape: bf16[128,128], index: 5, kind: input, shape index: {}]
  %s6 = inlined_call_operand.vmem [shape: f32[1,128], index: 6, kind: input, shape index: {}]
  %s7 = inlined_call_operand.hbm [shape: bf16[128,128], index: 7, kind: input, shape index: {}]
  %s8 = inlined_call_operand.vmem [shape: f32[1,128], index: 8, kind: input, shape index: {}]
  %s9 = inlined_call_operand.hbm [shape: bf16[128,128], index: 9, kind: input, shape index: {}]
  %s10 = inlined_call_operand.vmem [shape: f32[1,128], index: 10, kind: input, shape index: {}]
  %s11 = inlined_call_operand.vmem [shape: bf16[128,64], index: 11, kind: input, shape index: {}]
  %s12 = inlined_call_operand.vmem [shape: f32[1,64], index: 12, kind: input, shape index: {}]
  %s13 = inlined_call_operand.vmem [shape: bf16[64,128], index: 13, kind: input, shape index: {}]
  %s14 = inlined_call_operand.vmem [shape: f32[1,128], index: 14, kind: input, shape index: {}]
  %s15 = inlined_call_operand.hbm [shape: bf16[8,128], index: 15, kind: output, shape index: {}]
  %s16 = sld [smem:[#allocation0]]
  $region90: #{tpu_custom_call.1} parent=0
    _
  %s18 = ssub.s32 1, %s16
  %s19 = scalar_select 0, %s18, %s16
  $region1: #{tpu_custom_call.1} parent=0
    #allocation2 [shape = 'u8[14336]{0}', space=vmem, size = 0x3800, scoped, tag = 'input window, operand 0, single buffered']
    #allocation3 [shape = 's32[1]{0}', space=sflag, size = 0x4, scoped, tag = 'scoped memory for tpu_custom_call.1']
    #allocation4 [shape = 's32[1]{0}', space=sflag, size = 0x4, scoped, tag = 'scoped memory for tpu_custom_call.1']
    #allocation5 [shape = 'u8[458752]{0}', space=vmem, size = 0x70000, scoped, tag = 'input window, operand 1, single buffered']
    #allocation6 [shape = 's32[1]{0}', space=sflag, size = 0x4, scoped, tag = 'scoped memory for tpu_custom_call.1']
    #allocation7 [shape = 'u8[65536]{0}', space=vmem, size = 0x10000, scoped, tag = 'input window, operand 3, single buffered']
    #allocation8 [shape = 'u8[32768]{0}', space=vmem, size = 0x8000, scoped, tag = 'input window, operand 7, single buffered']
    #allocation9 [shape = 's32[1]{0}', space=sflag, size = 0x4, scoped, tag = 'scoped memory for tpu_custom_call.1']
    #allocation10 [shape = 'u8[32768]{0}', space=vmem, size = 0x8000, scoped, tag = 'input window, operand 9, single buffered']
    #allocation11 [shape = 'u8[2048]{0}', space=vmem, size = 0x800, scoped, tag = 'output window, operand 0, single buffered']
    %20 = vsyncpa [#allocation3], 0
    %21 = vsyncpa [#allocation6], 0
    %22 = vsyncpa [#allocation9], 0
    %23 = vsyncpa [#allocation4], 0
    // Predicated region
    $region2: #{tpu_custom_call.1} parent=1 // pred_check
      _
    $region3: #{tpu_custom_call.1} parent=1 // pred_check_branch
      %25 = sbr.rel (0) target = $region5
    $region4: #{tpu_custom_call.1} parent=1 // pred_region
      %s27 = ssub.s32 448, 448
      %28 = vsyncadd [#allocation3], %s27
      %s30 = sshll.u32 [#allocation2], 4
      %s31 = int_to_ptr.vmem [resolvable:$true] %s30
      %33 = dma.hbm_to_vmem [thread:$0]  %s0, 448, %s31, [#allocation3]
    $region5: #{tpu_custom_call.1} parent=1 // pred_fallthru
      _
    // Predicated region
    $region6: #{tpu_custom_call.1} parent=1 // pred_check
      _
    $region7: #{tpu_custom_call.1} parent=1 // pred_check_branch
      %35 = sbr.rel (0) target = $region9
    $region8: #{tpu_custom_call.1} parent=1 // pred_region
      %s37 = ssub.s32 14336, 14336
      %38 = vsyncadd [#allocation6], %s37
      %s39 = sshll.u32 [#allocation5], 4
      %s40 = int_to_ptr.vmem [resolvable:$true] %s39
      %45 = dma.hbm_to_vmem [thread:$0]  %s1, 14336, %s40, [#allocation6], 128, 128, 8
    $region9: #{tpu_custom_call.1} parent=1 // pred_fallthru
      _
    // Predicated region
    $region10: #{tpu_custom_call.1} parent=1 // pred_check
      _
    $region11: #{tpu_custom_call.1} parent=1 // pred_check_branch
      %47 = sbr.rel (0) target = $region13
    $region12: #{tpu_custom_call.1} parent=1 // pred_region
      _
    $region13: #{tpu_custom_call.1} parent=1 // pred_fallthru
      _
    // Predicated region
    $region14: #{tpu_custom_call.1} parent=1 // pred_check
      _
    $region15: #{tpu_custom_call.1} parent=1 // pred_check_branch
      %49 = sbr.rel (0) target = $region17
    $region16: #{tpu_custom_call.1} parent=1 // pred_region
      %s51 = ssub.s32 2048, 2048
      %52 = vsyncadd [#allocation6], %s51
      %s53 = sshll.u32 [#allocation7], 4
      %s54 = int_to_ptr.vmem [resolvable:$true] %s53
      %59 = dma.hbm_to_vmem [thread:$0]  %s3, 2048, %s54, [#allocation6], 64, 64, 4
    $region17: #{tpu_custom_call.1} parent=1 // pred_fallthru
      _
    // Predicated region
    $region18: #{tpu_custom_call.1} parent=1 // pred_check
      _
    $region19: #{tpu_custom_call.1} parent=1 // pred_check_branch
      %61 = sbr.rel (0) target = $region21
    $region20: #{tpu_custom_call.1} parent=1 // pred_region
      _
    $region21: #{tpu_custom_call.1} parent=1 // pred_fallthru
      _
    // Predicated region
    $region22: #{tpu_custom_call.1} parent=1 // pred_check
      _
    $region23: #{tpu_custom_call.1} parent=1 // pred_check_branch
      %63 = sbr.rel (0) target = $region25
    $region24: #{tpu_custom_call.1} parent=1 // pred_region
      _
    $region25: #{tpu_custom_call.1} parent=1 // pred_fallthru
      _
    // Predicated region
    $region26: #{tpu_custom_call.1} parent=1 // pred_check
      _
    $region27: #{tpu_custom_call.1} parent=1 // pred_check_branch
      %65 = sbr.rel (0) target = $region29
    $region28: #{tpu_custom_call.1} parent=1 // pred_region
      _
    $region29: #{tpu_custom_call.1} parent=1 // pred_fallthru
      _
    // Predicated region
    $region30: #{tpu_custom_call.1} parent=1 // pred_check
      _
    $region31: #{tpu_custom_call.1} parent=1 // pred_check_branch
      %67 = sbr.rel (0) target = $region33
    $region32: #{tpu_custom_call.1} parent=1 // pred_region
      %s69 = ssub.s32 1024, 1024
      %70 = vsyncadd [#allocation9], %s69
      %s71 = sshll.u32 [#allocation8], 4
      %s72 = int_to_ptr.vmem [resolvable:$true] %s71
      %77 = dma.hbm_to_vmem [thread:$0]  %s7, 1024, %s72, [#allocation9], 64, 64, 4
    $region33: #{tpu_custom_call.1} parent=1 // pred_fallthru
      _
    // Predicated region
    $region34: #{tpu_custom_call.1} parent=1 // pred_check
      _
    $region35: #{tpu_custom_call.1} parent=1 // pred_check_branch
      %79 = sbr.rel (0) target = $region37
    $region36: #{tpu_custom_call.1} parent=1 // pred_region
      _
    $region37: #{tpu_custom_call.1} parent=1 // pred_fallthru
      _
    // Predicated region
    $region38: #{tpu_custom_call.1} parent=1 // pred_check
      _
    $region39: #{tpu_custom_call.1} parent=1 // pred_check_branch
      %81 = sbr.rel (0) target = $region41
    $region40: #{tpu_custom_call.1} parent=1 // pred_region
      %s83 = ssub.s32 1024, 1024
      %84 = vsyncadd [#allocation9], %s83
      %s85 = sshll.u32 [#allocation10], 4
      %s86 = int_to_ptr.vmem [resolvable:$true] %s85
      %91 = dma.hbm_to_vmem [thread:$0]  %s9, 1024, %s86, [#allocation9], 64, 64, 4
    $region41: #{tpu_custom_call.1} parent=1 // pred_fallthru
      _
    // Predicated region
    $region42: #{tpu_custom_call.1} parent=1 // pred_check
      _
    $region43: #{tpu_custom_call.1} parent=1 // pred_check_branch
      %93 = sbr.rel (0) target = $region45
    $region44: #{tpu_custom_call.1} parent=1 // pred_region
      _
    $region45: #{tpu_custom_call.1} parent=1 // pred_fallthru
      _
    // Predicated region
    $region46: #{tpu_custom_call.1} parent=1 // pred_check
      _
    $region47: #{tpu_custom_call.1} parent=1 // pred_check_branch
      %95 = sbr.rel (0) target = $region49
    $region48: #{tpu_custom_call.1} parent=1 // pred_region
      _
    $region49: #{tpu_custom_call.1} parent=1 // pred_fallthru
      _
    // Predicated region
    $region50: #{tpu_custom_call.1} parent=1 // pred_check
      _
    $region51: #{tpu_custom_call.1} parent=1 // pred_check_branch
      %97 = sbr.rel (0) target = $region53
    $region52: #{tpu_custom_call.1} parent=1 // pred_region
      _
    $region53: #{tpu_custom_call.1} parent=1 // pred_fallthru
      _
    // Predicated region
    $region54: #{tpu_custom_call.1} parent=1 // pred_check
      _
    $region55: #{tpu_custom_call.1} parent=1 // pred_check_branch
      %99 = sbr.rel (0) target = $region57
    $region56: #{tpu_custom_call.1} parent=1 // pred_region
      _
    $region57: #{tpu_custom_call.1} parent=1 // pred_fallthru
      _
    // Predicated region
    $region58: #{tpu_custom_call.1} parent=1 // pred_check
      _
    $region59: #{tpu_custom_call.1} parent=1 // pred_check_branch
      %101 = sbr.rel (0) target = $region61
    $region60: #{tpu_custom_call.1} parent=1 // pred_region
      _
    $region61: #{tpu_custom_call.1} parent=1 // pred_fallthru
      _
    // Predicated region
    $region62: #{tpu_custom_call.1} parent=1 // pred_check
      _
    $region63: #{tpu_custom_call.1} parent=1 // pred_check_branch
      %103 = sbr.rel (0) target = $region65
    $region64: #{tpu_custom_call.1} parent=1 // pred_region
      %104 = dma.done [#allocation3], 448
    $region65: #{tpu_custom_call.1} parent=1 // pred_fallthru
      _
    // Predicated region
    $region66: #{tpu_custom_call.1} parent=1 // pred_check
      _
    $region67: #{tpu_custom_call.1} parent=1 // pred_check_branch
      %106 = sbr.rel (0) target = $region69
    $region68: #{tpu_custom_call.1} parent=1 // pred_region
      %107 = dma.done [#allocation6], 14336
    $region69: #{tpu_custom_call.1} parent=1 // pred_fallthru
      _
    // Predicated region
    $region70: #{tpu_custom_call.1} parent=1 // pred_check
      _
    $region71: #{tpu_custom_call.1} parent=1 // pred_check_branch
      %109 = sbr.rel (0) target = $region73
    $region72: #{tpu_custom_call.1} parent=1 // pred_region
      %110 = dma.done [#allocation6], 2048
    $region73: #{tpu_custom_call.1} parent=1 // pred_fallthru
      _
    // Predicated region
    $region74: #{tpu_custom_call.1} parent=1 // pred_check
      _
    $region75: #{tpu_custom_call.1} parent=1 // pred_check_branch
      %112 = sbr.rel (0) target = $region77
    $region76: #{tpu_custom_call.1} parent=1 // pred_region
      %113 = dma.done [#allocation9], 1024
    $region77: #{tpu_custom_call.1} parent=1 // pred_fallthru
      _
    // Predicated region
    $region78: #{tpu_custom_call.1} parent=1 // pred_check
      _
    $region79: #{tpu_custom_call.1} parent=1 // pred_check_branch
      %115 = sbr.rel (0) target = $region81
    $region80: #{tpu_custom_call.1} parent=1 // pred_region
      %116 = dma.done [#allocation9], 1024
    $region81: #{tpu_custom_call.1} parent=1 // pred_fallthru
      _
    %v118 = vld [vmem:[#allocation2] sm:$0xff]
    %v119 = vld [vmem:[#allocation2 + $0x8] sm:$0xff]
    %v120 = vld [vmem:[#allocation2 + $0x10] sm:$0xff]
    %v121 = vld [vmem:[#allocation2 + $0x18] sm:$0xf]
    %v126 = vunpack.c.l.b16 %v118
    %v127 = vunpack.c.h.b16 %v118
    %v128 = vunpack.c.l.b16 %v119
    %v129 = vunpack.c.h.b16 %v119
    %v130 = vunpack.c.l.b16 %v120
    %v131 = vunpack.c.h.b16 %v120
    %v132 = vunpack.c.l.b16 %v121
    %v133 = vpack.c.b16 %v126, %v126
    %v134 = vpack.c.b16 %v127, %v127
    %v135 = vpack.c.b16 %v128, %v128
    %v136 = vpack.c.b16 %v129, %v129
    %v137 = vpack.c.b16 %v130, %v130
    %v138 = vpack.c.b16 %v131, %v131
    %v139 = vpack.c.b16 %v132, %v132
    %vm146 = vcmask 130048
    %v149 = vsel %vm146, %v139, 0
    %v151 = vld [vmem:[#allocation5] sm:$0xff]
    %v152 = vld [vmem:[#allocation5 + $0x8] sm:$0xff]
    %v153 = vld [vmem:[#allocation5 + $0x10] sm:$0xff]
    %v154 = vld [vmem:[#allocation5 + $0x18] sm:$0xff]
    %v155 = vld [vmem:[#allocation5 + $0x20] sm:$0xff]
    %v156 = vld [vmem:[#allocation5 + $0x28] sm:$0xff]
    %v157 = vld [vmem:[#allocation5 + $0x30] sm:$0xff]
    %v158 = vld [vmem:[#allocation5 + $0x38] sm:$0xff]
    %v159 = vld [vmem:[#allocation5 + $0x40] sm:$0xff]
    %v160 = vld [vmem:[#allocation5 + $0x48] sm:$0xff]
    %v161 = vld [vmem:[#allocation5 + $0x50] sm:$0xff]
    %v162 = vld [vmem:[#allocation5 + $0x58] sm:$0xff]
    %v163 = vld [vmem:[#allocation5 + $0x60] sm:$0xff]
    %v164 = vld [vmem:[#allocation5 + $0x68] sm:$0xff]
    %v165 = vld [vmem:[#allocation5 + $0x70] sm:$0xff]
    %v166 = vld [vmem:[#allocation5 + $0x78] sm:$0xff]
    %v167 = vld [vmem:[#allocation5 + $0x80] sm:$0xff]
    %v168 = vld [vmem:[#allocation5 + $0x88] sm:$0xff]
    %v169 = vld [vmem:[#allocation5 + $0x90] sm:$0xff]
    %v170 = vld [vmem:[#allocation5 + $0x98] sm:$0xff]
    %v171 = vld [vmem:[#allocation5 + $0xa0] sm:$0xff]
    %v172 = vld [vmem:[#allocation5 + $0xa8] sm:$0xff]
    %v173 = vld [vmem:[#allocation5 + $0xb0] sm:$0xff]
    %v174 = vld [vmem:[#allocation5 + $0xb8] sm:$0xff]
    %v175 = vld [vmem:[#allocation5 + $0xc0] sm:$0xff]
    %v176 = vld [vmem:[#allocation5 + $0xc8] sm:$0xff]
    %v177 = vld [vmem:[#allocation5 + $0xd0] sm:$0xff]
    %v178 = vld [vmem:[#allocation5 + $0xd8] sm:$0xff]
    %v179 = vld [vmem:[#allocation5 + $0xe0] sm:$0xff]
    %v180 = vld [vmem:[#allocation5 + $0xe8] sm:$0xff]
    %v181 = vld [vmem:[#allocation5 + $0xf0] sm:$0xff]
    %v182 = vld [vmem:[#allocation5 + $0xf8] sm:$0xff]
    %v183 = vld [vmem:[#allocation5 + $0x100] sm:$0xff]
    %v184 = vld [vmem:[#allocation5 + $0x108] sm:$0xff]
    %v185 = vld [vmem:[#allocation5 + $0x110] sm:$0xff]
    %v186 = vld [vmem:[#allocation5 + $0x118] sm:$0xff]
    %v187 = vld [vmem:[#allocation5 + $0x120] sm:$0xff]
    %v188 = vld [vmem:[#allocation5 + $0x128] sm:$0xff]
    %v189 = vld [vmem:[#allocation5 + $0x130] sm:$0xff]
    %v190 = vld [vmem:[#allocation5 + $0x138] sm:$0xff]
    %v191 = vld [vmem:[#allocation5 + $0x140] sm:$0xff]
    %v192 = vld [vmem:[#allocation5 + $0x148] sm:$0xff]
    %v193 = vld [vmem:[#allocation5 + $0x150] sm:$0xff]
    %v194 = vld [vmem:[#allocation5 + $0x158] sm:$0xff]
    %v195 = vld [vmem:[#allocation5 + $0x160] sm:$0xff]
    %v196 = vld [vmem:[#allocation5 + $0x168] sm:$0xff]
    %v197 = vld [vmem:[#allocation5 + $0x170] sm:$0xff]
    %v198 = vld [vmem:[#allocation5 + $0x178] sm:$0xff]
    %v199 = vld [vmem:[#allocation5 + $0x180] sm:$0xff]
    %v200 = vld [vmem:[#allocation5 + $0x188] sm:$0xff]
    %v201 = vld [vmem:[#allocation5 + $0x190] sm:$0xff]
    %v202 = vld [vmem:[#allocation5 + $0x198] sm:$0xff]
    %v203 = vld [vmem:[#allocation5 + $0x1a0] sm:$0xff]
    %v204 = vld [vmem:[#allocation5 + $0x1a8] sm:$0xff]
    %v205 = vld [vmem:[#allocation5 + $0x1b0] sm:$0xff]
    %v206 = vld [vmem:[#allocation5 + $0x1b8] sm:$0xff]
    %v207 = vld [vmem:[#allocation5 + $0x1c0] sm:$0xff]
    %v208 = vld [vmem:[#allocation5 + $0x1c8] sm:$0xff]
    %v209 = vld [vmem:[#allocation5 + $0x1d0] sm:$0xff]
    %v210 = vld [vmem:[#allocation5 + $0x1d8] sm:$0xff]
    %v211 = vld [vmem:[#allocation5 + $0x1e0] sm:$0xff]
    %v212 = vld [vmem:[#allocation5 + $0x1e8] sm:$0xff]
    %v213 = vld [vmem:[#allocation5 + $0x1f0] sm:$0xff]
    %v214 = vld [vmem:[#allocation5 + $0x1f8] sm:$0xff]
    %v215 = vld [vmem:[#allocation5 + $0x200] sm:$0xff]
    %v216 = vld [vmem:[#allocation5 + $0x208] sm:$0xff]
    %v217 = vld [vmem:[#allocation5 + $0x210] sm:$0xff]
    %v218 = vld [vmem:[#allocation5 + $0x218] sm:$0xff]
    %v219 = vld [vmem:[#allocation5 + $0x220] sm:$0xff]
    %v220 = vld [vmem:[#allocation5 + $0x228] sm:$0xff]
    %v221 = vld [vmem:[#allocation5 + $0x230] sm:$0xff]
    %v222 = vld [vmem:[#allocation5 + $0x238] sm:$0xff]
    %v223 = vld [vmem:[#allocation5 + $0x240] sm:$0xff]
    %v224 = vld [vmem:[#allocation5 + $0x248] sm:$0xff]
    %v225 = vld [vmem:[#allocation5 + $0x250] sm:$0xff]
    %v226 = vld [vmem:[#allocation5 + $0x258] sm:$0xff]
    %v227 = vld [vmem:[#allocation5 + $0x260] sm:$0xff]
    %v228 = vld [vmem:[#allocation5 + $0x268] sm:$0xff]
    %v229 = vld [vmem:[#allocation5 + $0x270] sm:$0xff]
    %v230 = vld [vmem:[#allocation5 + $0x278] sm:$0xff]
    %v231 = vld [vmem:[#allocation5 + $0x280] sm:$0xff]
    %v232 = vld [vmem:[#allocation5 + $0x288] sm:$0xff]
    %v233 = vld [vmem:[#allocation5 + $0x290] sm:$0xff]
    %v234 = vld [vmem:[#allocation5 + $0x298] sm:$0xff]
    %v235 = vld [vmem:[#allocation5 + $0x2a0] sm:$0xff]
    %v236 = vld [vmem:[#allocation5 + $0x2a8] sm:$0xff]
    %v237 = vld [vmem:[#allocation5 + $0x2b0] sm:$0xff]
    %v238 = vld [vmem:[#allocation5 + $0x2b8] sm:$0xff]
    %v239 = vld [vmem:[#allocation5 + $0x2c0] sm:$0xff]
    %v240 = vld [vmem:[#allocation5 + $0x2c8] sm:$0xff]
    %v241 = vld [vmem:[#allocation5 + $0x2d0] sm:$0xff]
    %v242 = vld [vmem:[#allocation5 + $0x2d8] sm:$0xff]
    %v243 = vld [vmem:[#allocation5 + $0x2e0] sm:$0xff]
    %v244 = vld [vmem:[#allocation5 + $0x2e8] sm:$0xff]
    %v245 = vld [vmem:[#allocation5 + $0x2f0] sm:$0xff]
    %v246 = vld [vmem:[#allocation5 + $0x2f8] sm:$0xff]
    %v247 = vld [vmem:[#allocation5 + $0x300] sm:$0xff]
    %v248 = vld [vmem:[#allocation5 + $0x308] sm:$0xff]
    %v249 = vld [vmem:[#allocation5 + $0x310] sm:$0xff]
    %v250 = vld [vmem:[#allocation5 + $0x318] sm:$0xff]
    %v251 = vld [vmem:[#allocation5 + $0x320] sm:$0xff]
    %v252 = vld [vmem:[#allocation5 + $0x328] sm:$0xff]
    %v253 = vld [vmem:[#allocation5 + $0x330] sm:$0xff]
    %v254 = vld [vmem:[#allocation5 + $0x338] sm:$0xff]
    %v255 = vld [vmem:[#allocation5 + $0x340] sm:$0xff]
    %v256 = vld [vmem:[#allocation5 + $0x348] sm:$0xff]
    %v257 = vld [vmem:[#allocation5 + $0x350] sm:$0xff]
    %v258 = vld [vmem:[#allocation5 + $0x358] sm:$0xff]
    %v259 = vld [vmem:[#allocation5 + $0x360] sm:$0xff]
    %v260 = vld [vmem:[#allocation5 + $0x368] sm:$0xff]
    %v261 = vld [vmem:[#allocation5 + $0x370] sm:$0xff]
    %v262 = vld [vmem:[#allocation5 + $0x378] sm:$0xff]
    %v263 = vld [vmem:[%s2] sm:$0x3]
    %v265 = vlaneseq
    %v266 = vshrl.u32 %v265, 7
    %v267 = vsub.s32 0, %v266
    %v268 = vrot.slane %v263, %v267
    %v269 = vlaneseq
    %v270 = vshrl.u32 %v269, 7
    %v271 = vsub.s32 1, %v270
    %v272 = vrot.slane %v263, %v271
    %v387 = vunpack.c.l.b16 %v151
    %v388 = vunpack.c.h.b16 %v151
    %v389 = vunpack.c.l.b16 %v152
    %v390 = vunpack.c.h.b16 %v152
    %v391 = vunpack.c.l.b16 %v153
    %v392 = vunpack.c.h.b16 %v153
    %v393 = vunpack.c.l.b16 %v154
    %v394 = vunpack.c.h.b16 %v154
    %v395 = vunpack.c.l.b16 %v155
    %v396 = vunpack.c.h.b16 %v155
    %v397 = vunpack.c.l.b16 %v156
    %v398 = vunpack.c.h.b16 %v156
    %v399 = vunpack.c.l.b16 %v157
    %v400 = vunpack.c.h.b16 %v157
    %v401 = vunpack.c.l.b16 %v158
    %v402 = vunpack.c.h.b16 %v158
    %v403 = vunpack.c.l.b16 %v159
    %v404 = vunpack.c.h.b16 %v159
    %v405 = vunpack.c.l.b16 %v160
    %v406 = vunpack.c.h.b16 %v160
    %v407 = vunpack.c.l.b16 %v161
    %v408 = vunpack.c.h.b16 %v161
    %v409 = vunpack.c.l.b16 %v162
    %v410 = vunpack.c.h.b16 %v162
    %v411 = vunpack.c.l.b16 %v163
    %v412 = vunpack.c.h.b16 %v163
    %v413 = vunpack.c.l.b16 %v164
    %v414 = vunpack.c.h.b16 %v164
    %v415 = vunpack.c.l.b16 %v165
    %v416 = vunpack.c.h.b16 %v165
    %v417 = vunpack.c.l.b16 %v166
    %v418 = vunpack.c.h.b16 %v166
    %v419 = vunpack.c.l.b16 %v167
    %v420 = vunpack.c.h.b16 %v167
    %v421 = vunpack.c.l.b16 %v168
    %v422 = vunpack.c.h.b16 %v168
    %v423 = vunpack.c.l.b16 %v169
    %v424 = vunpack.c.h.b16 %v169
    %v425 = vunpack.c.l.b16 %v170
    %v426 = vunpack.c.h.b16 %v170
    %v427 = vunpack.c.l.b16 %v171
    %v428 = vunpack.c.h.b16 %v171
    %v429 = vunpack.c.l.b16 %v172
    %v430 = vunpack.c.h.b16 %v172
    %v431 = vunpack.c.l.b16 %v173
    %v432 = vunpack.c.h.b16 %v173
    %v433 = vunpack.c.l.b16 %v174
    %v434 = vunpack.c.h.b16 %v174
    %v435 = vunpack.c.l.b16 %v175
    %v436 = vunpack.c.h.b16 %v175
    %v437 = vunpack.c.l.b16 %v176
    %v438 = vunpack.c.h.b16 %v176
    %v439 = vunpack.c.l.b16 %v177
    %v440 = vunpack.c.h.b16 %v177
    %v441 = vunpack.c.l.b16 %v178
    %v442 = vunpack.c.h.b16 %v178
    %v443 = vunpack.c.l.b16 %v179
    %v444 = vunpack.c.h.b16 %v179
    %v445 = vunpack.c.l.b16 %v180
    %v446 = vunpack.c.h.b16 %v180
    %v447 = vunpack.c.l.b16 %v181
    %v448 = vunpack.c.h.b16 %v181
    %v449 = vunpack.c.l.b16 %v182
    %v450 = vunpack.c.h.b16 %v182
    %v451 = vunpack.c.l.b16 %v183
    %v452 = vunpack.c.h.b16 %v183
    %v453 = vunpack.c.l.b16 %v184
    %v454 = vunpack.c.h.b16 %v184
    %v455 = vunpack.c.l.b16 %v185
    %v456 = vunpack.c.h.b16 %v185
    %v457 = vunpack.c.l.b16 %v186
    %v458 = vunpack.c.h.b16 %v186
    %v459 = vunpack.c.l.b16 %v187
    %v460 = vunpack.c.h.b16 %v187
    %v461 = vunpack.c.l.b16 %v188
    %v462 = vunpack.c.h.b16 %v188
    %v463 = vunpack.c.l.b16 %v189
    %v464 = vunpack.c.h.b16 %v189
    %v465 = vunpack.c.l.b16 %v190
    %v466 = vunpack.c.h.b16 %v190
    %v467 = vunpack.c.l.b16 %v191
    %v468 = vunpack.c.h.b16 %v191
    %v469 = vunpack.c.l.b16 %v192
    %v470 = vunpack.c.h.b16 %v192
    %v471 = vunpack.c.l.b16 %v193
    %v472 = vunpack.c.h.b16 %v193
    %v473 = vunpack.c.l.b16 %v194
    %v474 = vunpack.c.h.b16 %v194
    %v475 = vunpack.c.l.b16 %v195
    %v476 = vunpack.c.h.b16 %v195
    %v477 = vunpack.c.l.b16 %v196
    %v478 = vunpack.c.h.b16 %v196
    %v479 = vunpack.c.l.b16 %v197
    %v480 = vunpack.c.h.b16 %v197
    %v481 = vunpack.c.l.b16 %v198
    %v482 = vunpack.c.h.b16 %v198
    %v483 = vunpack.c.l.b16 %v199
    %v484 = vunpack.c.h.b16 %v199
    %v485 = vunpack.c.l.b16 %v200
    %v486 = vunpack.c.h.b16 %v200
    %v487 = vunpack.c.l.b16 %v201
    %v488 = vunpack.c.h.b16 %v201
    %v489 = vunpack.c.l.b16 %v202
    %v490 = vunpack.c.h.b16 %v202
    %v491 = vunpack.c.l.b16 %v203
    %v492 = vunpack.c.h.b16 %v203
    %v493 = vunpack.c.l.b16 %v204
    %v494 = vunpack.c.h.b16 %v204
    %v495 = vunpack.c.l.b16 %v205
    %v496 = vunpack.c.h.b16 %v205
    %v497 = vunpack.c.l.b16 %v206
    %v498 = vunpack.c.h.b16 %v206
    %v499 = vunpack.c.l.b16 %v207
    %v500 = vunpack.c.h.b16 %v207
    %v501 = vunpack.c.l.b16 %v208
    %v502 = vunpack.c.h.b16 %v208
    %v503 = vunpack.c.l.b16 %v209
    %v504 = vunpack.c.h.b16 %v209
    %v505 = vunpack.c.l.b16 %v210
    %v506 = vunpack.c.h.b16 %v210
    %v507 = vunpack.c.l.b16 %v211
    %v508 = vunpack.c.h.b16 %v211
    %v509 = vunpack.c.l.b16 %v212
    %v510 = vunpack.c.h.b16 %v212
    %v511 = vunpack.c.l.b16 %v213
    %v512 = vunpack.c.h.b16 %v213
    %v513 = vunpack.c.l.b16 %v214
    %v514 = vunpack.c.h.b16 %v214
    %v515 = vunpack.c.l.b16 %v215
    %v516 = vunpack.c.h.b16 %v215
    %v517 = vunpack.c.l.b16 %v216
    %v518 = vunpack.c.h.b16 %v216
    %v519 = vunpack.c.l.b16 %v217
    %v520 = vunpack.c.h.b16 %v217
    %v521 = vunpack.c.l.b16 %v218
    %v522 = vunpack.c.h.b16 %v218
    %v523 = vunpack.c.l.b16 %v219
    %v524 = vunpack.c.h.b16 %v219
    %v525 = vunpack.c.l.b16 %v220
    %v526 = vunpack.c.h.b16 %v220
    %v527 = vunpack.c.l.b16 %v221
    %v528 = vunpack.c.h.b16 %v221
    %v529 = vunpack.c.l.b16 %v222
    %v530 = vunpack.c.h.b16 %v222
    %v531 = vunpack.c.l.b16 %v223
    %v532 = vunpack.c.h.b16 %v223
    %v533 = vunpack.c.l.b16 %v224
    %v534 = vunpack.c.h.b16 %v224
    %v535 = vunpack.c.l.b16 %v225
    %v536 = vunpack.c.h.b16 %v225
    %v537 = vunpack.c.l.b16 %v226
    %v538 = vunpack.c.h.b16 %v226
    %v539 = vunpack.c.l.b16 %v227
    %v540 = vunpack.c.h.b16 %v227
    %v541 = vunpack.c.l.b16 %v228
    %v542 = vunpack.c.h.b16 %v228
    %v543 = vunpack.c.l.b16 %v229
    %v544 = vunpack.c.h.b16 %v229
    %v545 = vunpack.c.l.b16 %v230
    %v546 = vunpack.c.h.b16 %v230
    %v547 = vunpack.c.l.b16 %v231
    %v548 = vunpack.c.h.b16 %v231
    %v549 = vunpack.c.l.b16 %v232
    %v550 = vunpack.c.h.b16 %v232
    %v551 = vunpack.c.l.b16 %v233
    %v552 = vunpack.c.h.b16 %v233
    %v553 = vunpack.c.l.b16 %v234
    %v554 = vunpack.c.h.b16 %v234
    %v555 = vunpack.c.l.b16 %v235
    %v556 = vunpack.c.h.b16 %v235
    %v557 = vunpack.c.l.b16 %v236
    %v558 = vunpack.c.h.b16 %v236
    %v559 = vunpack.c.l.b16 %v237
    %v560 = vunpack.c.h.b16 %v237
    %v561 = vunpack.c.l.b16 %v238
    %v562 = vunpack.c.h.b16 %v238
    %v563 = vunpack.c.l.b16 %v239
    %v564 = vunpack.c.h.b16 %v239
    %v565 = vunpack.c.l.b16 %v240
    %v566 = vunpack.c.h.b16 %v240
    %v567 = vunpack.c.l.b16 %v241
    %v568 = vunpack.c.h.b16 %v241
    %v569 = vunpack.c.l.b16 %v242
    %v570 = vunpack.c.h.b16 %v242
    %v571 = vunpack.c.l.b16 %v243
    %v572 = vunpack.c.h.b16 %v243
    %v573 = vunpack.c.l.b16 %v244
    %v574 = vunpack.c.h.b16 %v244
    %v575 = vunpack.c.l.b16 %v245
    %v576 = vunpack.c.h.b16 %v245
    %v577 = vunpack.c.l.b16 %v246
    %v578 = vunpack.c.h.b16 %v246
    %v579 = vunpack.c.l.b16 %v247
    %v580 = vunpack.c.h.b16 %v247
    %v581 = vunpack.c.l.b16 %v248
    %v582 = vunpack.c.h.b16 %v248
    %v583 = vunpack.c.l.b16 %v249
    %v584 = vunpack.c.h.b16 %v249
    %v585 = vunpack.c.l.b16 %v250
    %v586 = vunpack.c.h.b16 %v250
    %v587 = vunpack.c.l.b16 %v251
    %v588 = vunpack.c.h.b16 %v251
    %v589 = vunpack.c.l.b16 %v252
    %v590 = vunpack.c.h.b16 %v252
    %v591 = vunpack.c.l.b16 %v253
    %v592 = vunpack.c.h.b16 %v253
    %v593 = vunpack.c.l.b16 %v254
    %v594 = vunpack.c.h.b16 %v254
    %v595 = vunpack.c.l.b16 %v255
    %v596 = vunpack.c.h.b16 %v255
    %v597 = vunpack.c.l.b16 %v256
    %v598 = vunpack.c.h.b16 %v256
    %v599 = vunpack.c.l.b16 %v257
    %v600 = vunpack.c.h.b16 %v257
    %v601 = vunpack.c.l.b16 %v258
    %v602 = vunpack.c.h.b16 %v258
    %v603 = vunpack.c.l.b16 %v259
    %v604 = vunpack.c.h.b16 %v259
    %v605 = vunpack.c.l.b16 %v260
    %v606 = vunpack.c.h.b16 %v260
    %v607 = vunpack.c.l.b16 %v261
    %v608 = vunpack.c.h.b16 %v261
    %v609 = vunpack.c.l.b16 %v262
    %v610 = vunpack.c.h.b16 %v262
    %v611 = vpack.c.b16 %v389, %v387
    %v612 = vpack.c.b16 %v390, %v388
    %v613 = vpack.c.b16 %v393, %v391
    %v614 = vpack.c.b16 %v394, %v392
    %v615 = vpack.c.b16 %v397, %v395
    %v616 = vpack.c.b16 %v398, %v396
    %v617 = vpack.c.b16 %v401, %v399
    %v618 = vpack.c.b16 %v402, %v400
    %v619 = vpack.c.b16 %v405, %v403
    %v620 = vpack.c.b16 %v406, %v404
    %v621 = vpack.c.b16 %v409, %v407
    %v622 = vpack.c.b16 %v410, %v408
    %v623 = vpack.c.b16 %v413, %v411
    %v624 = vpack.c.b16 %v414, %v412
    %v625 = vpack.c.b16 %v417, %v415
    %v626 = vpack.c.b16 %v418, %v416
    %v627 = vpack.c.b16 %v421, %v419
    %v628 = vpack.c.b16 %v422, %v420
    %v629 = vpack.c.b16 %v425, %v423
    %v630 = vpack.c.b16 %v426, %v424
    %v631 = vpack.c.b16 %v429, %v427
    %v632 = vpack.c.b16 %v430, %v428
    %v633 = vpack.c.b16 %v433, %v431
    %v634 = vpack.c.b16 %v434, %v432
    %v635 = vpack.c.b16 %v437, %v435
    %v636 = vpack.c.b16 %v438, %v436
    %v637 = vpack.c.b16 %v441, %v439
    %v638 = vpack.c.b16 %v442, %v440
    %v639 = vpack.c.b16 %v445, %v443
    %v640 = vpack.c.b16 %v446, %v444
    %v641 = vpack.c.b16 %v449, %v447
    %v642 = vpack.c.b16 %v450, %v448
    %v643 = vpack.c.b16 %v453, %v451
    %v644 = vpack.c.b16 %v454, %v452
    %v645 = vpack.c.b16 %v457, %v455
    %v646 = vpack.c.b16 %v458, %v456
    %v647 = vpack.c.b16 %v461, %v459
    %v648 = vpack.c.b16 %v462, %v460
    %v649 = vpack.c.b16 %v465, %v463
    %v650 = vpack.c.b16 %v466, %v464
    %v651 = vpack.c.b16 %v469, %v467
    %v652 = vpack.c.b16 %v470, %v468
    %v653 = vpack.c.b16 %v473, %v471
    %v654 = vpack.c.b16 %v474, %v472
    %v655 = vpack.c.b16 %v477, %v475
    %v656 = vpack.c.b16 %v478, %v476
    %v657 = vpack.c.b16 %v481, %v479
    %v658 = vpack.c.b16 %v482, %v480
    %v659 = vpack.c.b16 %v485, %v483
    %v660 = vpack.c.b16 %v486, %v484
    %v661 = vpack.c.b16 %v489, %v487
    %v662 = vpack.c.b16 %v490, %v488
    %v663 = vpack.c.b16 %v493, %v491
    %v664 = vpack.c.b16 %v494, %v492
    %v665 = vpack.c.b16 %v497, %v495
    %v666 = vpack.c.b16 %v498, %v496
    %v667 = vpack.c.b16 %v501, %v499
    %v668 = vpack.c.b16 %v502, %v500
    %v669 = vpack.c.b16 %v505, %v503
    %v670 = vpack.c.b16 %v506, %v504
    %v671 = vpack.c.b16 %v509, %v507
    %v672 = vpack.c.b16 %v510, %v508
    %v673 = vpack.c.b16 %v513, %v511
    %v674 = vpack.c.b16 %v514, %v512
    %v675 = vpack.c.b16 %v517, %v515
    %v676 = vpack.c.b16 %v518, %v516
    %v677 = vpack.c.b16 %v521, %v519
    %v678 = vpack.c.b16 %v522, %v520
    %v679 = vpack.c.b16 %v525, %v523
    %v680 = vpack.c.b16 %v526, %v524
    %v681 = vpack.c.b16 %v529, %v527
    %v682 = vpack.c.b16 %v530, %v528
    %v683 = vpack.c.b16 %v533, %v531
    %v684 = vpack.c.b16 %v534, %v532
    %v685 = vpack.c.b16 %v537, %v535
    %v686 = vpack.c.b16 %v538, %v536
    %v687 = vpack.c.b16 %v541, %v539
    %v688 = vpack.c.b16 %v542, %v540
    %v689 = vpack.c.b16 %v545, %v543
    %v690 = vpack.c.b16 %v546, %v544
    %v691 = vpack.c.b16 %v549, %v547
    %v692 = vpack.c.b16 %v550, %v548
    %v693 = vpack.c.b16 %v553, %v551
    %v694 = vpack.c.b16 %v554, %v552
    %v695 = vpack.c.b16 %v557, %v555
    %v696 = vpack.c.b16 %v558, %v556
    %v697 = vpack.c.b16 %v561, %v559
    %v698 = vpack.c.b16 %v562, %v560
    %v699 = vpack.c.b16 %v565, %v563
    %v700 = vpack.c.b16 %v566, %v564
    %v701 = vpack.c.b16 %v569, %v567
    %v702 = vpack.c.b16 %v570, %v568
    %v703 = vpack.c.b16 %v573, %v571
    %v704 = vpack.c.b16 %v574, %v572
    %v705 = vpack.c.b16 %v577, %v575
    %v706 = vpack.c.b16 %v578, %v576
    %v707 = vpack.c.b16 %v581, %v579
    %v708 = vpack.c.b16 %v582, %v580
    %v709 = vpack.c.b16 %v585, %v583
    %v710 = vpack.c.b16 %v586, %v584
    %v711 = vpack.c.b16 %v589, %v587
    %v712 = vpack.c.b16 %v590, %v588
    %v713 = vpack.c.b16 %v593, %v591
    %v714 = vpack.c.b16 %v594, %v592
    %v715 = vpack.c.b16 %v597, %v595
    %v716 = vpack.c.b16 %v598, %v596
    %v717 = vpack.c.b16 %v601, %v599
    %v718 = vpack.c.b16 %v602, %v600
    %v719 = vpack.c.b16 %v605, %v603
    %v720 = vpack.c.b16 %v606, %v604
    %v721 = vpack.c.b16 %v609, %v607
    %v722 = vpack.c.b16 %v610, %v608
    %835 = vmatprep.subr.bf16.mxu0 %v626
    %836 = vmatpush1.bf16.msra.mxu0 %v625
    %837 = vmatprep.subr.bf16.mxu0 %v624
    %838 = vmatpush1.bf16.msra.mxu0 %v623
    %839 = vmatprep.subr.bf16.mxu0 %v622
    %840 = vmatpush1.bf16.msra.mxu0 %v621
    %841 = vmatprep.subr.bf16.mxu0 %v620
    %842 = vmatpush1.bf16.msra.mxu0 %v619
    %843 = vmatprep.subr.bf16.mxu0 %v618
    %844 = vmatpush1.bf16.msra.mxu0 %v617
    %845 = vmatprep.subr.bf16.mxu0 %v616
    %846 = vmatpush1.bf16.msra.mxu0 %v615
    %847 = vmatprep.subr.bf16.mxu0 %v614
    %848 = vmatpush1.bf16.msra.mxu0 %v613
    %849 = vmatprep.subr.bf16.mxu0 %v612
    %850 = vmatpush1.bf16.msra.mxu0 %v611
    %851 = vmatprep.subr.bf16.mxu0 %v642
    %852 = vmatpush2.bf16.msra.mxu0 %v641
    %853 = vmatprep.subr.bf16.mxu0 %v640
    %854 = vmatpush2.bf16.msra.mxu0 %v639
    %855 = vmatprep.subr.bf16.mxu0 %v638
    %856 = vmatpush2.bf16.msra.mxu0 %v637
    %857 = vmatprep.subr.bf16.mxu0 %v636
    %858 = vmatpush2.bf16.msra.mxu0 %v635
    %859 = vmatprep.subr.bf16.mxu0 %v634
    %860 = vmatpush2.bf16.msra.mxu0 %v633
    %861 = vmatprep.subr.bf16.mxu0 %v632
    %862 = vmatpush2.bf16.msra.mxu0 %v631
    %863 = vmatprep.subr.bf16.mxu0 %v630
    %864 = vmatpush2.bf16.msra.mxu0 %v629
    %865 = vmatprep.subr.bf16.mxu0 %v628
    %866 = vmatpush2.bf16.msra.mxu0 %v627
    %867 = vmatprep.mubr.bf16.mxu0 %v134
    %868 = vmatmul.mubr.bf16.gmra.mxu0 %v133
    %v869 = vpop.f32.mrf.mxu0
    %v870 = vadd.f32 %v268, %v869
    %v871 = vpop.f32.mrf.mxu0
    %v872 = vadd.f32 %v272, %v871
    %v873 = vpop.f32.mrf.mxu0
    %v874 = vpop.f32.mrf.mxu0
    %875 = vdwg.mxu0
    %876 = vmatprep.subr.bf16.mxu0 %v658
    %877 = vmatpush1.bf16.msra.mxu0 %v657
    %878 = vmatprep.subr.bf16.mxu0 %v656
    %879 = vmatpush1.bf16.msra.mxu0 %v655
    %880 = vmatprep.subr.bf16.mxu0 %v654
    %881 = vmatpush1.bf16.msra.mxu0 %v653
    %882 = vmatprep.subr.bf16.mxu0 %v652
    %883 = vmatpush1.bf16.msra.mxu0 %v651
    %884 = vmatprep.subr.bf16.mxu0 %v650
    %885 = vmatpush1.bf16.msra.mxu0 %v649
    %886 = vmatprep.subr.bf16.mxu0 %v648
    %887 = vmatpush1.bf16.msra.mxu0 %v647
    %888 = vmatprep.subr.bf16.mxu0 %v646
    %889 = vmatpush1.bf16.msra.mxu0 %v645
    %890 = vmatprep.subr.bf16.mxu0 %v644
    %891 = vmatpush1.bf16.msra.mxu0 %v643
    %892 = vmatprep.subr.bf16.mxu0 %v674
    %893 = vmatpush2.bf16.msra.mxu0 %v673
    %894 = vmatprep.subr.bf16.mxu0 %v672
    %895 = vmatpush2.bf16.msra.mxu0 %v671
    %896 = vmatprep.subr.bf16.mxu0 %v670
    %897 = vmatpush2.bf16.msra.mxu0 %v669
    %898 = vmatprep.subr.bf16.mxu0 %v668
    %899 = vmatpush2.bf16.msra.mxu0 %v667
    %900 = vmatprep.subr.bf16.mxu0 %v666
    %901 = vmatpush2.bf16.msra.mxu0 %v665
    %902 = vmatprep.subr.bf16.mxu0 %v664
    %903 = vmatpush2.bf16.msra.mxu0 %v663
    %904 = vmatprep.subr.bf16.mxu0 %v662
    %905 = vmatpush2.bf16.msra.mxu0 %v661
    %906 = vmatprep.subr.bf16.mxu0 %v660
    %907 = vmatpush2.bf16.msra.mxu0 %v659
    %908 = vmatprep.mubr.bf16.mxu0 %v136
    %909 = vmatmul.mubr.bf16.gmra.mxu0 %v135
    %v910 = vpop.f32.mrf.mxu0
    %v911 = vadd.f32 %v870, %v910
    %v912 = vpop.f32.mrf.mxu0
    %v913 = vadd.f32 %v872, %v912
    %v914 = vpop.f32.mrf.mxu0
    %v915 = vpop.f32.mrf.mxu0
    %916 = vdwg.mxu0
    %917 = vmatprep.subr.bf16.mxu0 %v690
    %918 = vmatpush1.bf16.msra.mxu0 %v689
    %919 = vmatprep.subr.bf16.mxu0 %v688
    %920 = vmatpush1.bf16.msra.mxu0 %v687
    %921 = vmatprep.subr.bf16.mxu0 %v686
    %922 = vmatpush1.bf16.msra.mxu0 %v685
    %923 = vmatprep.subr.bf16.mxu0 %v684
    %924 = vmatpush1.bf16.msra.mxu0 %v683
    %925 = vmatprep.subr.bf16.mxu0 %v682
    %926 = vmatpush1.bf16.msra.mxu0 %v681
    %927 = vmatprep.subr.bf16.mxu0 %v680
    %928 = vmatpush1.bf16.msra.mxu0 %v679
    %929 = vmatprep.subr.bf16.mxu0 %v678
    %930 = vmatpush1.bf16.msra.mxu0 %v677
    %931 = vmatprep.subr.bf16.mxu0 %v676
    %932 = vmatpush1.bf16.msra.mxu0 %v675
    %933 = vmatprep.subr.bf16.mxu0 %v706
    %934 = vmatpush2.bf16.msra.mxu0 %v705
    %935 = vmatprep.subr.bf16.mxu0 %v704
    %936 = vmatpush2.bf16.msra.mxu0 %v703
    %937 = vmatprep.subr.bf16.mxu0 %v702
    %938 = vmatpush2.bf16.msra.mxu0 %v701
    %939 = vmatprep.subr.bf16.mxu0 %v700
    %940 = vmatpush2.bf16.msra.mxu0 %v699
    %941 = vmatprep.subr.bf16.mxu0 %v698
    %942 = vmatpush2.bf16.msra.mxu0 %v697
    %943 = vmatprep.subr.bf16.mxu0 %v696
    %944 = vmatpush2.bf16.msra.mxu0 %v695
    %945 = vmatprep.subr.bf16.mxu0 %v694
    %946 = vmatpush2.bf16.msra.mxu0 %v693
    %947 = vmatprep.subr.bf16.mxu0 %v692
    %948 = vmatpush2.bf16.msra.mxu0 %v691
    %949 = vmatprep.mubr.bf16.mxu0 %v138
    %950 = vmatmul.mubr.bf16.gmra.mxu0 %v137
    %v951 = vpop.f32.mrf.mxu0
    %v952 = vadd.f32 %v911, %v951
    %v953 = vpop.f32.mrf.mxu0
    %v954 = vadd.f32 %v913, %v953
    %v955 = vpop.f32.mrf.mxu0
    %v956 = vpop.f32.mrf.mxu0
    %957 = vdwg.mxu0
    %958 = vmatprep.subr.bf16.mxu0 %v722
    %959 = vmatpush1.bf16.msra.mxu0 %v721
    %960 = vmatprep.subr.bf16.mxu0 %v720
    %961 = vmatpush1.bf16.msra.mxu0 %v719
    %962 = vmatprep.subr.bf16.mxu0 %v718
    %963 = vmatpush1.bf16.msra.mxu0 %v717
    %964 = vmatprep.subr.bf16.mxu0 %v716
    %965 = vmatpush1.bf16.msra.mxu0 %v715
    %966 = vmatprep.subr.bf16.mxu0 %v714
    %967 = vmatpush1.bf16.msra.mxu0 %v713
    %968 = vmatprep.subr.bf16.mxu0 %v712
    %969 = vmatpush1.bf16.msra.mxu0 %v711
    %970 = vmatprep.subr.bf16.mxu0 %v710
    %971 = vmatpush1.bf16.msra.mxu0 %v709
    %972 = vmatprep.subr.bf16.mxu0 %v708
    %973 = vmatpush1.bf16.msra.mxu0 %v707
    %974 = vmatprep.subr.bf16.mxu0 0
    %975 = vmatpush2.bf16.msra.mxu0 0
    %976 = vmatprep.subr.bf16.mxu0 0
    %977 = vmatpush2.bf16.msra.mxu0 0
    %978 = vmatprep.subr.bf16.mxu0 0
    %979 = vmatpush2.bf16.msra.mxu0 0
    %980 = vmatprep.subr.bf16.mxu0 0
    %981 = vmatpush2.bf16.msra.mxu0 0
    %982 = vmatprep.subr.bf16.mxu0 0
    %983 = vmatpush2.bf16.msra.mxu0 0
    %984 = vmatprep.subr.bf16.mxu0 0
    %985 = vmatpush2.bf16.msra.mxu0 0
    %986 = vmatprep.subr.bf16.mxu0 0
    %987 = vmatpush2.bf16.msra.mxu0 0
    %988 = vmatprep.subr.bf16.mxu0 0
    %989 = vmatpush2.bf16.msra.mxu0 0
    %990 = vmatprep.mubr.bf16.mxu0 0
    %991 = vmatmul.mubr.bf16.gmra.mxu0 %v149
    %v992 = vpop.f32.mrf.mxu0
    %v993 = vadd.f32 %v952, %v992
    %v994 = vpop.f32.mrf.mxu0
    %v995 = vadd.f32 %v954, %v994
    %v996 = vpop.f32.mrf.mxu0
    %v997 = vpop.f32.mrf.mxu0
    %998 = vdwg.mxu0
    %v999 = vmax.f32 %v993, 0.0
    %v1000 = vmax.f32 %v995, 0.0
    %v1001 = vpack.c.bf16 %v999, %v999
    %v1002 = vpack.c.bf16 %v1000, %v1000
    %v1003 = vld [vmem:[#allocation7] sm:$0xf]
    %v1004 = vld [vmem:[#allocation7 + $0x4] sm:$0xf]
    %v1005 = vld [vmem:[#allocation7 + $0x8] sm:$0xf]
    %v1006 = vld [vmem:[#allocation7 + $0xc] sm:$0xf]
    %v1007 = vld [vmem:[#allocation7 + $0x10] sm:$0xf]
    %v1008 = vld [vmem:[#allocation7 + $0x14] sm:$0xf]
    %v1009 = vld [vmem:[#allocation7 + $0x18] sm:$0xf]
    %v1010 = vld [vmem:[#allocation7 + $0x1c] sm:$0xf]
    %v1011 = vld [vmem:[#allocation7 + $0x20] sm:$0xf]
    %v1012 = vld [vmem:[#allocation7 + $0x24] sm:$0xf]
    %v1013 = vld [vmem:[#allocation7 + $0x28] sm:$0xf]
    %v1014 = vld [vmem:[#allocation7 + $0x2c] sm:$0xf]
    %v1015 = vld [vmem:[#allocation7 + $0x30] sm:$0xf]
    %v1016 = vld [vmem:[#allocation7 + $0x34] sm:$0xf]
    %v1017 = vld [vmem:[#allocation7 + $0x38] sm:$0xf]
    %v1018 = vld [vmem:[#allocation7 + $0x3c] sm:$0xf]
    %v1019 = vld [vmem:[#allocation7 + $0x40] sm:$0xf]
    %v1020 = vld [vmem:[#allocation7 + $0x44] sm:$0xf]
    %v1021 = vld [vmem:[#allocation7 + $0x48] sm:$0xf]
    %v1022 = vld [vmem:[#allocation7 + $0x4c] sm:$0xf]
    %v1023 = vld [vmem:[#allocation7 + $0x50] sm:$0xf]
    %v1024 = vld [vmem:[#allocation7 + $0x54] sm:$0xf]
    %v1025 = vld [vmem:[#allocation7 + $0x58] sm:$0xf]
    %v1026 = vld [vmem:[#allocation7 + $0x5c] sm:$0xf]
    %v1027 = vld [vmem:[#allocation7 + $0x60] sm:$0xf]
    %v1028 = vld [vmem:[#allocation7 + $0x64] sm:$0xf]
    %v1029 = vld [vmem:[#allocation7 + $0x68] sm:$0xf]
    %v1030 = vld [vmem:[#allocation7 + $0x6c] sm:$0xf]
    %v1031 = vld [vmem:[#allocation7 + $0x70] sm:$0xf]
    %v1032 = vld [vmem:[#allocation7 + $0x74] sm:$0xf]
    %v1033 = vld [vmem:[#allocation7 + $0x78] sm:$0xf]
    %v1034 = vld [vmem:[#allocation7 + $0x7c] sm:$0xf]
    %v1035 = vld [vmem:[%s4] sm:$0x1]
    %v1037 = vlaneseq
    %v1038 = vshrl.u32 %v1037, 7
    %v1039 = vsub.s32 0, %v1038
    %v1040 = vrot.slane %v1035, %v1039
    %v1074 = vunpack.c.l.b16 %v1003
    %v1075 = vunpack.c.l.b16 %v1004
    %v1076 = vunpack.c.l.b16 %v1005
    %v1077 = vunpack.c.l.b16 %v1006
    %v1078 = vunpack.c.l.b16 %v1007
    %v1079 = vunpack.c.l.b16 %v1008
    %v1080 = vunpack.c.l.b16 %v1009
    %v1081 = vunpack.c.l.b16 %v1010
    %v1082 = vunpack.c.l.b16 %v1011
    %v1083 = vunpack.c.l.b16 %v1012
    %v1084 = vunpack.c.l.b16 %v1013
    %v1085 = vunpack.c.l.b16 %v1014
    %v1086 = vunpack.c.l.b16 %v1015
    %v1087 = vunpack.c.l.b16 %v1016
    %v1088 = vunpack.c.l.b16 %v1017
    %v1089 = vunpack.c.l.b16 %v1018
    %v1090 = vunpack.c.l.b16 %v1019
    %v1091 = vunpack.c.l.b16 %v1020
    %v1092 = vunpack.c.l.b16 %v1021
    %v1093 = vunpack.c.l.b16 %v1022
    %v1094 = vunpack.c.l.b16 %v1023
    %v1095 = vunpack.c.l.b16 %v1024
    %v1096 = vunpack.c.l.b16 %v1025
    %v1097 = vunpack.c.l.b16 %v1026
    %v1098 = vunpack.c.l.b16 %v1027
    %v1099 = vunpack.c.l.b16 %v1028
    %v1100 = vunpack.c.l.b16 %v1029
    %v1101 = vunpack.c.l.b16 %v1030
    %v1102 = vunpack.c.l.b16 %v1031
    %v1103 = vunpack.c.l.b16 %v1032
    %v1104 = vunpack.c.l.b16 %v1033
    %v1105 = vunpack.c.l.b16 %v1034
    %v1106 = vpack.c.b16 %v1075, %v1074
    %v1107 = vpack.c.b16 %v1077, %v1076
    %v1108 = vpack.c.b16 %v1079, %v1078
    %v1109 = vpack.c.b16 %v1081, %v1080
    %v1110 = vpack.c.b16 %v1083, %v1082
    %v1111 = vpack.c.b16 %v1085, %v1084
    %v1112 = vpack.c.b16 %v1087, %v1086
    %v1113 = vpack.c.b16 %v1089, %v1088
    %v1114 = vpack.c.b16 %v1091, %v1090
    %v1115 = vpack.c.b16 %v1093, %v1092
    %v1116 = vpack.c.b16 %v1095, %v1094
    %v1117 = vpack.c.b16 %v1097, %v1096
    %v1118 = vpack.c.b16 %v1099, %v1098
    %v1119 = vpack.c.b16 %v1101, %v1100
    %v1120 = vpack.c.b16 %v1103, %v1102
    %v1121 = vpack.c.b16 %v1105, %v1104
    %1138 = vmatprep.subr.bf16.mxu0 0
    %1139 = vmatpush1.bf16.msra.mxu0 %v1113
    %1140 = vmatprep.subr.bf16.mxu0 0
    %1141 = vmatpush1.bf16.msra.mxu0 %v1112
    %1142 = vmatprep.subr.bf16.mxu0 0
    %1143 = vmatpush1.bf16.msra.mxu0 %v1111
    %1144 = vmatprep.subr.bf16.mxu0 0
    %1145 = vmatpush1.bf16.msra.mxu0 %v1110
    %1146 = vmatprep.subr.bf16.mxu0 0
    %1147 = vmatpush1.bf16.msra.mxu0 %v1109
    %1148 = vmatprep.subr.bf16.mxu0 0
    %1149 = vmatpush1.bf16.msra.mxu0 %v1108
    %1150 = vmatprep.subr.bf16.mxu0 0
    %1151 = vmatpush1.bf16.msra.mxu0 %v1107
    %1152 = vmatprep.subr.bf16.mxu0 0
    %1153 = vmatpush1.bf16.msra.mxu0 %v1106
    %1154 = vmatprep.subr.bf16.mxu0 0
    %1155 = vmatpush2.bf16.msra.mxu0 %v1121
    %1156 = vmatprep.subr.bf16.mxu0 0
    %1157 = vmatpush2.bf16.msra.mxu0 %v1120
    %1158 = vmatprep.subr.bf16.mxu0 0
    %1159 = vmatpush2.bf16.msra.mxu0 %v1119
    %1160 = vmatprep.subr.bf16.mxu0 0
    %1161 = vmatpush2.bf16.msra.mxu0 %v1118
    %1162 = vmatprep.subr.bf16.mxu0 0
    %1163 = vmatpush2.bf16.msra.mxu0 %v1117
    %1164 = vmatprep.subr.bf16.mxu0 0
    %1165 = vmatpush2.bf16.msra.mxu0 %v1116
    %1166 = vmatprep.subr.bf16.mxu0 0
    %1167 = vmatpush2.bf16.msra.mxu0 %v1115
    %1168 = vmatprep.subr.bf16.mxu0 0
    %1169 = vmatpush2.bf16.msra.mxu0 %v1114
    %1170 = vmatprep.mubr.bf16.mxu0 %v1002
    %1171 = vmatmul.mubr.bf16.gmra.mxu0 %v1001
    %v1172 = vpop.f32.mrf.mxu0
    %v1173 = vadd.f32 %v1040, %v1172
    %v1174 = vpop.f32.mrf.mxu0
    %v1175 = vpop.f32.mrf.mxu0
    %v1176 = vpop.f32.mrf.mxu0
    %1177 = vdwg.mxu0
    %v1178 = vmax.f32 %v1173, 0.0
    %v1179 = vpack.c.bf16 %v1178, %v1178
    %v1180 = vld [vmem:[%s5] sm:$0xf]
    %v1181 = vld [vmem:[%s5 + $0x4] sm:$0xf]
    %v1182 = vld [vmem:[%s5 + $0x8] sm:$0xf]
    %v1183 = vld [vmem:[%s5 + $0xc] sm:$0xf]
    %v1184 = vld [vmem:[%s5 + $0x10] sm:$0xf]
    %v1185 = vld [vmem:[%s5 + $0x14] sm:$0xf]
    %v1186 = vld [vmem:[%s5 + $0x18] sm:$0xf]
    %v1187 = vld [vmem:[%s5 + $0x1c] sm:$0xf]
    %v1188 = vld [vmem:[%s5 + $0x20] sm:$0xf]
    %v1189 = vld [vmem:[%s5 + $0x24] sm:$0xf]
    %v1190 = vld [vmem:[%s5 + $0x28] sm:$0xf]
    %v1191 = vld [vmem:[%s5 + $0x2c] sm:$0xf]
    %v1192 = vld [vmem:[%s5 + $0x30] sm:$0xf]
    %v1193 = vld [vmem:[%s5 + $0x34] sm:$0xf]
    %v1194 = vld [vmem:[%s5 + $0x38] sm:$0xf]
    %v1195 = vld [vmem:[%s5 + $0x3c] sm:$0xf]
    %v1196 = vld [vmem:[%s6] sm:$0x1]
    %v1198 = vlaneseq
    %v1199 = vshrl.u32 %v1198, 7
    %v1200 = vsub.s32 0, %v1199
    %v1201 = vrot.slane %v1196, %v1200
    %v1219 = vunpack.c.l.b16 %v1180
    %v1220 = vunpack.c.l.b16 %v1181
    %v1221 = vunpack.c.l.b16 %v1182
    %v1222 = vunpack.c.l.b16 %v1183
    %v1223 = vunpack.c.l.b16 %v1184
    %v1224 = vunpack.c.l.b16 %v1185
    %v1225 = vunpack.c.l.b16 %v1186
    %v1226 = vunpack.c.l.b16 %v1187
    %v1227 = vunpack.c.l.b16 %v1188
    %v1228 = vunpack.c.l.b16 %v1189
    %v1229 = vunpack.c.l.b16 %v1190
    %v1230 = vunpack.c.l.b16 %v1191
    %v1231 = vunpack.c.l.b16 %v1192
    %v1232 = vunpack.c.l.b16 %v1193
    %v1233 = vunpack.c.l.b16 %v1194
    %v1234 = vunpack.c.l.b16 %v1195
    %v1235 = vpack.c.b16 %v1220, %v1219
    %v1236 = vpack.c.b16 %v1222, %v1221
    %v1237 = vpack.c.b16 %v1224, %v1223
    %v1238 = vpack.c.b16 %v1226, %v1225
    %v1239 = vpack.c.b16 %v1228, %v1227
    %v1240 = vpack.c.b16 %v1230, %v1229
    %v1241 = vpack.c.b16 %v1232, %v1231
    %v1242 = vpack.c.b16 %v1234, %v1233
    %1251 = vmatprep.subr.bf16.mxu0 0
    %1252 = vmatpush1.bf16.msra.mxu0 %v1242
    %1253 = vmatprep.subr.bf16.mxu0 0
    %1254 = vmatpush1.bf16.msra.mxu0 %v1241
    %1255 = vmatprep.subr.bf16.mxu0 0
    %1256 = vmatpush1.bf16.msra.mxu0 %v1240
    %1257 = vmatprep.subr.bf16.mxu0 0
    %1258 = vmatpush1.bf16.msra.mxu0 %v1239
    %1259 = vmatprep.subr.bf16.mxu0 0
    %1260 = vmatpush1.bf16.msra.mxu0 %v1238
    %1261 = vmatprep.subr.bf16.mxu0 0
    %1262 = vmatpush1.bf16.msra.mxu0 %v1237
    %1263 = vmatprep.subr.bf16.mxu0 0
    %1264 = vmatpush1.bf16.msra.mxu0 %v1236
    %1265 = vmatprep.subr.bf16.mxu0 0
    %1266 = vmatpush1.bf16.msra.mxu0 %v1235
    %1267 = vmatprep.subr.bf16.mxu0 0
    %1268 = vmatpush2.bf16.msra.mxu0 0
    %1269 = vmatprep.subr.bf16.mxu0 0
    %1270 = vmatpush2.bf16.msra.mxu0 0
    %1271 = vmatprep.subr.bf16.mxu0 0
    %1272 = vmatpush2.bf16.msra.mxu0 0
    %1273 = vmatprep.subr.bf16.mxu0 0
    %1274 = vmatpush2.bf16.msra.mxu0 0
    %1275 = vmatprep.subr.bf16.mxu0 0
    %1276 = vmatpush2.bf16.msra.mxu0 0
    %1277 = vmatprep.subr.bf16.mxu0 0
    %1278 = vmatpush2.bf16.msra.mxu0 0
    %1279 = vmatprep.subr.bf16.mxu0 0
    %1280 = vmatpush2.bf16.msra.mxu0 0
    %1281 = vmatprep.subr.bf16.mxu0 0
    %1282 = vmatpush2.bf16.msra.mxu0 0
    %1283 = vmatprep.mubr.bf16.mxu0 0
    %1284 = vmatmul.mubr.bf16.gmra.mxu0 %v1179
    %v1285 = vpop.f32.mrf.mxu0
    %v1286 = vadd.f32 %v1201, %v1285
    %v1287 = vpop.f32.mrf.mxu0
    %v1288 = vpop.f32.mrf.mxu0
    %v1289 = vpop.f32.mrf.mxu0
    %1290 = vdwg.mxu0
    %v1291 = vmax.f32 %v1286, 0.0
    %v1292 = vpack.c.bf16 %v1291, %v1291
    %v1293 = vld [vmem:[#allocation8] sm:$0xf]
    %v1294 = vld [vmem:[#allocation8 + $0x4] sm:$0xf]
    %v1295 = vld [vmem:[#allocation8 + $0x8] sm:$0xf]
    %v1296 = vld [vmem:[#allocation8 + $0xc] sm:$0xf]
    %v1297 = vld [vmem:[#allocation8 + $0x10] sm:$0xf]
    %v1298 = vld [vmem:[#allocation8 + $0x14] sm:$0xf]
    %v1299 = vld [vmem:[#allocation8 + $0x18] sm:$0xf]
    %v1300 = vld [vmem:[#allocation8 + $0x1c] sm:$0xf]
    %v1301 = vld [vmem:[#allocation8 + $0x20] sm:$0xf]
    %v1302 = vld [vmem:[#allocation8 + $0x24] sm:$0xf]
    %v1303 = vld [vmem:[#allocation8 + $0x28] sm:$0xf]
    %v1304 = vld [vmem:[#allocation8 + $0x2c] sm:$0xf]
    %v1305 = vld [vmem:[#allocation8 + $0x30] sm:$0xf]
    %v1306 = vld [vmem:[#allocation8 + $0x34] sm:$0xf]
    %v1307 = vld [vmem:[#allocation8 + $0x38] sm:$0xf]
    %v1308 = vld [vmem:[#allocation8 + $0x3c] sm:$0xf]
    %v1309 = vld [vmem:[%s8] sm:$0x1]
    %v1311 = vlaneseq
    %v1312 = vshrl.u32 %v1311, 7
    %v1313 = vsub.s32 0, %v1312
    %v1314 = vrot.slane %v1309, %v1313
    %v1332 = vunpack.c.l.b16 %v1293
    %v1333 = vunpack.c.l.b16 %v1294
    %v1334 = vunpack.c.l.b16 %v1295
    %v1335 = vunpack.c.l.b16 %v1296
    %v1336 = vunpack.c.l.b16 %v1297
    %v1337 = vunpack.c.l.b16 %v1298
    %v1338 = vunpack.c.l.b16 %v1299
    %v1339 = vunpack.c.l.b16 %v1300
    %v1340 = vunpack.c.l.b16 %v1301
    %v1341 = vunpack.c.l.b16 %v1302
    %v1342 = vunpack.c.l.b16 %v1303
    %v1343 = vunpack.c.l.b16 %v1304
    %v1344 = vunpack.c.l.b16 %v1305
    %v1345 = vunpack.c.l.b16 %v1306
    %v1346 = vunpack.c.l.b16 %v1307
    %v1347 = vunpack.c.l.b16 %v1308
    %v1348 = vpack.c.b16 %v1333, %v1332
    %v1349 = vpack.c.b16 %v1335, %v1334
    %v1350 = vpack.c.b16 %v1337, %v1336
    %v1351 = vpack.c.b16 %v1339, %v1338
    %v1352 = vpack.c.b16 %v1341, %v1340
    %v1353 = vpack.c.b16 %v1343, %v1342
    %v1354 = vpack.c.b16 %v1345, %v1344
    %v1355 = vpack.c.b16 %v1347, %v1346
    %1364 = vmatprep.subr.bf16.mxu0 0
    %1365 = vmatpush1.bf16.msra.mxu0 %v1355
    %1366 = vmatprep.subr.bf16.mxu0 0
    %1367 = vmatpush1.bf16.msra.mxu0 %v1354
    %1368 = vmatprep.subr.bf16.mxu0 0
    %1369 = vmatpush1.bf16.msra.mxu0 %v1353
    %1370 = vmatprep.subr.bf16.mxu0 0
    %1371 = vmatpush1.bf16.msra.mxu0 %v1352
    %1372 = vmatprep.subr.bf16.mxu0 0
    %1373 = vmatpush1.bf16.msra.mxu0 %v1351
    %1374 = vmatprep.subr.bf16.mxu0 0
    %1375 = vmatpush1.bf16.msra.mxu0 %v1350
    %1376 = vmatprep.subr.bf16.mxu0 0
    %1377 = vmatpush1.bf16.msra.mxu0 %v1349
    %1378 = vmatprep.subr.bf16.mxu0 0
    %1379 = vmatpush1.bf16.msra.mxu0 %v1348
    %1380 = vmatprep.subr.bf16.mxu0 0
    %1381 = vmatpush2.bf16.msra.mxu0 0
    %1382 = vmatprep.subr.bf16.mxu0 0
    %1383 = vmatpush2.bf16.msra.mxu0 0
    %1384 = vmatprep.subr.bf16.mxu0 0
    %1385 = vmatpush2.bf16.msra.mxu0 0
    %1386 = vmatprep.subr.bf16.mxu0 0
    %1387 = vmatpush2.bf16.msra.mxu0 0
    %1388 = vmatprep.subr.bf16.mxu0 0
    %1389 = vmatpush2.bf16.msra.mxu0 0
    %1390 = vmatprep.subr.bf16.mxu0 0
    %1391 = vmatpush2.bf16.msra.mxu0 0
    %1392 = vmatprep.subr.bf16.mxu0 0
    %1393 = vmatpush2.bf16.msra.mxu0 0
    %1394 = vmatprep.subr.bf16.mxu0 0
    %1395 = vmatpush2.bf16.msra.mxu0 0
    %1396 = vmatprep.mubr.bf16.mxu0 0
    %1397 = vmatmul.mubr.bf16.gmra.mxu0 %v1292
    %v1398 = vpop.f32.mrf.mxu0
    %v1399 = vadd.f32 %v1314, %v1398
    %v1400 = vpop.f32.mrf.mxu0
    %v1401 = vpop.f32.mrf.mxu0
    %v1402 = vpop.f32.mrf.mxu0
    %1403 = vdwg.mxu0
    %v1404 = vmax.f32 %v1399, 0.0
    %v1405 = vpack.c.bf16 %v1404, %v1404
    %v1406 = vld [vmem:[#allocation10] sm:$0xf]
    %v1407 = vld [vmem:[#allocation10 + $0x4] sm:$0xf]
    %v1408 = vld [vmem:[#allocation10 + $0x8] sm:$0xf]
    %v1409 = vld [vmem:[#allocation10 + $0xc] sm:$0xf]
    %v1410 = vld [vmem:[#allocation10 + $0x10] sm:$0xf]
    %v1411 = vld [vmem:[#allocation10 + $0x14] sm:$0xf]
    %v1412 = vld [vmem:[#allocation10 + $0x18] sm:$0xf]
    %v1413 = vld [vmem:[#allocation10 + $0x1c] sm:$0xf]
    %v1414 = vld [vmem:[#allocation10 + $0x20] sm:$0xf]
    %v1415 = vld [vmem:[#allocation10 + $0x24] sm:$0xf]
    %v1416 = vld [vmem:[#allocation10 + $0x28] sm:$0xf]
    %v1417 = vld [vmem:[#allocation10 + $0x2c] sm:$0xf]
    %v1418 = vld [vmem:[#allocation10 + $0x30] sm:$0xf]
    %v1419 = vld [vmem:[#allocation10 + $0x34] sm:$0xf]
    %v1420 = vld [vmem:[#allocation10 + $0x38] sm:$0xf]
    %v1421 = vld [vmem:[#allocation10 + $0x3c] sm:$0xf]
    %v1422 = vld [vmem:[%s10] sm:$0x1]
    %v1424 = vlaneseq
    %v1425 = vshrl.u32 %v1424, 7
    %v1426 = vsub.s32 0, %v1425
    %v1427 = vrot.slane %v1422, %v1426
    %v1445 = vunpack.c.l.b16 %v1406
    %v1446 = vunpack.c.l.b16 %v1407
    %v1447 = vunpack.c.l.b16 %v1408
    %v1448 = vunpack.c.l.b16 %v1409
    %v1449 = vunpack.c.l.b16 %v1410
    %v1450 = vunpack.c.l.b16 %v1411
    %v1451 = vunpack.c.l.b16 %v1412
    %v1452 = vunpack.c.l.b16 %v1413
    %v1453 = vunpack.c.l.b16 %v1414
    %v1454 = vunpack.c.l.b16 %v1415
    %v1455 = vunpack.c.l.b16 %v1416
    %v1456 = vunpack.c.l.b16 %v1417
    %v1457 = vunpack.c.l.b16 %v1418
    %v1458 = vunpack.c.l.b16 %v1419
    %v1459 = vunpack.c.l.b16 %v1420
    %v1460 = vunpack.c.l.b16 %v1421
    %v1461 = vpack.c.b16 %v1446, %v1445
    %v1462 = vpack.c.b16 %v1448, %v1447
    %v1463 = vpack.c.b16 %v1450, %v1449
    %v1464 = vpack.c.b16 %v1452, %v1451
    %v1465 = vpack.c.b16 %v1454, %v1453
    %v1466 = vpack.c.b16 %v1456, %v1455
    %v1467 = vpack.c.b16 %v1458, %v1457
    %v1468 = vpack.c.b16 %v1460, %v1459
    %1477 = vmatprep.subr.bf16.mxu0 0
    %1478 = vmatpush1.bf16.msra.mxu0 %v1468
    %1479 = vmatprep.subr.bf16.mxu0 0
    %1480 = vmatpush1.bf16.msra.mxu0 %v1467
    %1481 = vmatprep.subr.bf16.mxu0 0
    %1482 = vmatpush1.bf16.msra.mxu0 %v1466
    %1483 = vmatprep.subr.bf16.mxu0 0
    %1484 = vmatpush1.bf16.msra.mxu0 %v1465
    %1485 = vmatprep.subr.bf16.mxu0 0
    %1486 = vmatpush1.bf16.msra.mxu0 %v1464
    %1487 = vmatprep.subr.bf16.mxu0 0
    %1488 = vmatpush1.bf16.msra.mxu0 %v1463
    %1489 = vmatprep.subr.bf16.mxu0 0
    %1490 = vmatpush1.bf16.msra.mxu0 %v1462
    %1491 = vmatprep.subr.bf16.mxu0 0
    %1492 = vmatpush1.bf16.msra.mxu0 %v1461
    %1493 = vmatprep.subr.bf16.mxu0 0
    %1494 = vmatpush2.bf16.msra.mxu0 0
    %1495 = vmatprep.subr.bf16.mxu0 0
    %1496 = vmatpush2.bf16.msra.mxu0 0
    %1497 = vmatprep.subr.bf16.mxu0 0
    %1498 = vmatpush2.bf16.msra.mxu0 0
    %1499 = vmatprep.subr.bf16.mxu0 0
    %1500 = vmatpush2.bf16.msra.mxu0 0
    %1501 = vmatprep.subr.bf16.mxu0 0
    %1502 = vmatpush2.bf16.msra.mxu0 0
    %1503 = vmatprep.subr.bf16.mxu0 0
    %1504 = vmatpush2.bf16.msra.mxu0 0
    %1505 = vmatprep.subr.bf16.mxu0 0
    %1506 = vmatpush2.bf16.msra.mxu0 0
    %1507 = vmatprep.subr.bf16.mxu0 0
    %1508 = vmatpush2.bf16.msra.mxu0 0
    %1509 = vmatprep.mubr.bf16.mxu0 0
    %1510 = vmatmul.mubr.bf16.gmra.mxu0 %v1405
    %v1511 = vpop.f32.mrf.mxu0
    %v1512 = vadd.f32 %v1427, %v1511
    %v1513 = vpop.f32.mrf.mxu0
    %v1514 = vpop.f32.mrf.mxu0
    %v1515 = vpop.f32.mrf.mxu0
    %1516 = vdwg.mxu0
    %v1517 = vmax.f32 %v1512, 0.0
    %v1518 = vpack.c.bf16 %v1517, %v1517
    %v1519 = vld [vmem:[%s11] sm:$0xf]
    %v1520 = vld [vmem:[%s11 + $0x4] sm:$0xf]
    %v1521 = vld [vmem:[%s11 + $0x8] sm:$0xf]
    %v1522 = vld [vmem:[%s11 + $0xc] sm:$0xf]
    %v1523 = vld [vmem:[%s11 + $0x10] sm:$0xf]
    %v1524 = vld [vmem:[%s11 + $0x14] sm:$0xf]
    %v1525 = vld [vmem:[%s11 + $0x18] sm:$0xf]
    %v1526 = vld [vmem:[%s11 + $0x1c] sm:$0xf]
    %v1527 = vld [vmem:[%s11 + $0x20] sm:$0xf]
    %v1528 = vld [vmem:[%s11 + $0x24] sm:$0xf]
    %v1529 = vld [vmem:[%s11 + $0x28] sm:$0xf]
    %v1530 = vld [vmem:[%s11 + $0x2c] sm:$0xf]
    %v1531 = vld [vmem:[%s11 + $0x30] sm:$0xf]
    %v1532 = vld [vmem:[%s11 + $0x34] sm:$0xf]
    %v1533 = vld [vmem:[%s11 + $0x38] sm:$0xf]
    %v1534 = vld [vmem:[%s11 + $0x3c] sm:$0xf]
    %v1535 = vld [vmem:[%s12] sm:$0x1]
    %v1537 = vlaneseq
    %v1538 = vshrl.u32 %v1537, 7
    %v1539 = vsub.s32 0, %v1538
    %v1540 = vrot.slane %v1535, %v1539
    %v1558 = vunpack.c.l.b16 %v1519
    %v1559 = vunpack.c.l.b16 %v1520
    %v1560 = vunpack.c.l.b16 %v1521
    %v1561 = vunpack.c.l.b16 %v1522
    %v1562 = vunpack.c.l.b16 %v1523
    %v1563 = vunpack.c.l.b16 %v1524
    %v1564 = vunpack.c.l.b16 %v1525
    %v1565 = vunpack.c.l.b16 %v1526
    %v1566 = vunpack.c.l.b16 %v1527
    %v1567 = vunpack.c.l.b16 %v1528
    %v1568 = vunpack.c.l.b16 %v1529
    %v1569 = vunpack.c.l.b16 %v1530
    %v1570 = vunpack.c.l.b16 %v1531
    %v1571 = vunpack.c.l.b16 %v1532
    %v1572 = vunpack.c.l.b16 %v1533
    %v1573 = vunpack.c.l.b16 %v1534
    %v1574 = vpack.c.b16 %v1559, %v1558
    %v1575 = vpack.c.b16 %v1561, %v1560
    %v1576 = vpack.c.b16 %v1563, %v1562
    %v1577 = vpack.c.b16 %v1565, %v1564
    %v1578 = vpack.c.b16 %v1567, %v1566
    %v1579 = vpack.c.b16 %v1569, %v1568
    %v1580 = vpack.c.b16 %v1571, %v1570
    %v1581 = vpack.c.b16 %v1573, %v1572
    %1590 = vmatprep.subr.bf16.mxu0 0
    %1591 = vmatpush1.bf16.msra.mxu0 %v1581
    %1592 = vmatprep.subr.bf16.mxu0 0
    %1593 = vmatpush1.bf16.msra.mxu0 %v1580
    %1594 = vmatprep.subr.bf16.mxu0 0
    %1595 = vmatpush1.bf16.msra.mxu0 %v1579
    %1596 = vmatprep.subr.bf16.mxu0 0
    %1597 = vmatpush1.bf16.msra.mxu0 %v1578
    %1598 = vmatprep.subr.bf16.mxu0 0
    %1599 = vmatpush1.bf16.msra.mxu0 %v1577
    %1600 = vmatprep.subr.bf16.mxu0 0
    %1601 = vmatpush1.bf16.msra.mxu0 %v1576
    %1602 = vmatprep.subr.bf16.mxu0 0
    %1603 = vmatpush1.bf16.msra.mxu0 %v1575
    %1604 = vmatprep.subr.bf16.mxu0 0
    %1605 = vmatpush1.bf16.msra.mxu0 %v1574
    %1606 = vmatprep.subr.bf16.mxu0 0
    %1607 = vmatpush2.bf16.msra.mxu0 0
    %1608 = vmatprep.subr.bf16.mxu0 0
    %1609 = vmatpush2.bf16.msra.mxu0 0
    %1610 = vmatprep.subr.bf16.mxu0 0
    %1611 = vmatpush2.bf16.msra.mxu0 0
    %1612 = vmatprep.subr.bf16.mxu0 0
    %1613 = vmatpush2.bf16.msra.mxu0 0
    %1614 = vmatprep.subr.bf16.mxu0 0
    %1615 = vmatpush2.bf16.msra.mxu0 0
    %1616 = vmatprep.subr.bf16.mxu0 0
    %1617 = vmatpush2.bf16.msra.mxu0 0
    %1618 = vmatprep.subr.bf16.mxu0 0
    %1619 = vmatpush2.bf16.msra.mxu0 0
    %1620 = vmatprep.subr.bf16.mxu0 0
    %1621 = vmatpush2.bf16.msra.mxu0 0
    %1622 = vmatprep.mubr.bf16.mxu0 0
    %1623 = vmatmul.mubr.bf16.gmra.mxu0 %v1518
    %v1624 = vpop.f32.mrf.mxu0
    %v1625 = vadd.f32 %v1540, %v1624
    %v1626 = vpop.f32.mrf.mxu0
    %v1627 = vpop.f32.mrf.mxu0
    %v1628 = vpop.f32.mrf.mxu0
    %1629 = vdwg.mxu0
    %v1630 = vmax.f32 %v1625, 0.0
    %v1631 = vpack.c.bf16 %v1630, %v1630
    %v1632 = vld [vmem:[%s13] sm:$0xf]
    %v1633 = vld [vmem:[%s13 + $0x4] sm:$0xf]
    %v1634 = vld [vmem:[%s13 + $0x8] sm:$0xf]
    %v1635 = vld [vmem:[%s13 + $0xc] sm:$0xf]
    %v1636 = vld [vmem:[%s13 + $0x10] sm:$0xf]
    %v1637 = vld [vmem:[%s13 + $0x14] sm:$0xf]
    %v1638 = vld [vmem:[%s13 + $0x18] sm:$0xf]
    %v1639 = vld [vmem:[%s13 + $0x1c] sm:$0xf]
    %v1640 = vld [vmem:[%s14] sm:$0x1]
    %v1642 = vlaneseq
    %v1643 = vshrl.u32 %v1642, 7
    %v1644 = vsub.s32 0, %v1643
    %v1645 = vrot.slane %v1640, %v1644
    %v1655 = vunpack.c.l.b16 %v1632
    %v1656 = vunpack.c.l.b16 %v1633
    %v1657 = vunpack.c.l.b16 %v1634
    %v1658 = vunpack.c.l.b16 %v1635
    %v1659 = vunpack.c.l.b16 %v1636
    %v1660 = vunpack.c.l.b16 %v1637
    %v1661 = vunpack.c.l.b16 %v1638
    %v1662 = vunpack.c.l.b16 %v1639
    %v1663 = vpack.c.b16 %v1656, %v1655
    %v1664 = vpack.c.b16 %v1658, %v1657
    %v1665 = vpack.c.b16 %v1660, %v1659
    %v1666 = vpack.c.b16 %v1662, %v1661
    %vm1671 = vcmask 523264
    %v1673 = vsel %vm1671, %v1631, 0
    %1675 = vmatprep.subr.bf16.mxu0 0
    %1676 = vmatpush1.bf16.msra.mxu0 0
    %1677 = vmatprep.subr.bf16.mxu0 0
    %1678 = vmatpush1.bf16.msra.mxu0 0
    %1679 = vmatprep.subr.bf16.mxu0 0
    %1680 = vmatpush1.bf16.msra.mxu0 0
    %1681 = vmatprep.subr.bf16.mxu0 0
    %1682 = vmatpush1.bf16.msra.mxu0 0
    %1683 = vmatprep.subr.bf16.mxu0 0
    %1684 = vmatpush1.bf16.msra.mxu0 %v1666
    %1685 = vmatprep.subr.bf16.mxu0 0
    %1686 = vmatpush1.bf16.msra.mxu0 %v1665
    %1687 = vmatprep.subr.bf16.mxu0 0
    %1688 = vmatpush1.bf16.msra.mxu0 %v1664
    %1689 = vmatprep.subr.bf16.mxu0 0
    %1690 = vmatpush1.bf16.msra.mxu0 %v1663
    %1691 = vmatprep.subr.bf16.mxu0 0
    %1692 = vmatpush2.bf16.msra.mxu0 0
    %1693 = vmatprep.subr.bf16.mxu0 0
    %1694 = vmatpush2.bf16.msra.mxu0 0
    %1695 = vmatprep.subr.bf16.mxu0 0
    %1696 = vmatpush2.bf16.msra.mxu0 0
    %1697 = vmatprep.subr.bf16.mxu0 0
    %1698 = vmatpush2.bf16.msra.mxu0 0
    %1699 = vmatprep.subr.bf16.mxu0 0
    %1700 = vmatpush2.bf16.msra.mxu0 0
    %1701 = vmatprep.subr.bf16.mxu0 0
    %1702 = vmatpush2.bf16.msra.mxu0 0
    %1703 = vmatprep.subr.bf16.mxu0 0
    %1704 = vmatpush2.bf16.msra.mxu0 0
    %1705 = vmatprep.subr.bf16.mxu0 0
    %1706 = vmatpush2.bf16.msra.mxu0 0
    %1707 = vmatprep.mubr.bf16.mxu0 0
    %1708 = vmatmul.mubr.bf16.gmra.mxu0 %v1673
    %v1709 = vpop.f32.mrf.mxu0
    %v1710 = vadd.f32 %v1645, %v1709
    %v1711 = vpop.f32.mrf.mxu0
    %v1712 = vpop.f32.mrf.mxu0
    %v1713 = vpop.f32.mrf.mxu0
    %1714 = vdwg.mxu0
    %v1715 = vmax.f32 %v1710, 0.0
    %v1716 = vpack.c.bf16 %v1715, %v1715
    %1717 = vst [vmem:[#allocation11] sm:$0xf] %v1716
    // Predicated region
    $region82: #{tpu_custom_call.1} parent=1 // pred_check
      _
    $region83: #{tpu_custom_call.1} parent=1 // pred_check_branch
      %1719 = sbr.rel (0) target = $region85
    $region84: #{tpu_custom_call.1} parent=1 // pred_region
      %s1721 = ssub.s32 64, 64
      %1722 = vsyncadd [#allocation4], %s1721
      %s1724 = sshll.u32 [#allocation11], 4
      %s1725 = int_to_ptr.vmem [resolvable:$true] %s1724
      %1727 = dma.vmem_to_hbm [thread:$0]  %s1725, 64, %s15, [#allocation4]
    $region85: #{tpu_custom_call.1} parent=1 // pred_fallthru
      _
    // Predicated region
    $region86: #{tpu_custom_call.1} parent=1 // pred_check
      _
    $region87: #{tpu_custom_call.1} parent=1 // pred_check_branch
      %1729 = sbr.rel (0) target = $region89
    $region88: #{tpu_custom_call.1} parent=1 // pred_region
      %1730 = dma.done [#allocation4], 64
    $region89: #{tpu_custom_call.1} parent=1 // pred_fallthru
      _
    %1731 = vsyncpa [#allocation3], 1
    %1732 = vsyncpa [#allocation6], 1
    %1733 = vsyncpa [#allocation9], 1
    %1734 = vsyncpa [#allocation4], 1

</llo_original>
